<compile_context>
chip_gen: v7x
topology: tpu7x:2x2x1
jax: 0.10.0
libtpu: 0.0.40
codegen_flags: <defaults>
</compile_context>

<pallas_src>
import functools
import math

import jax
import jax.numpy as jnp
from jax.experimental import pallas as pl
from jax.experimental.pallas import tpu as pltpu


def _round_up(x, m):
    return ((x + m - 1) // m) * m


# ----------------------------------------------------------------------------
# Pallas kernel: one GRU direction of one layer, full time loop inside.
# grid=(2,) over directions (fwd / bwd), marked "parallel".
#   len_ref   : (Bp, 1)      int32   sequence lengths (padded batch rows = 0)
#   gates_ref : (T, Bp, 3Hp) f32     precomputed x@W_ih^T + folded biases
#   whh_ref   : (Hp, 3Hp)    f32     fused, pre-transposed recurrent weights
#   bhn_ref   : (2, 1, Hp)   f32     b_hn per direction (needed inside r*(...))
#   out_ref   : (T, Bp, Hp)  f32     per-step outputs (zero on padded steps)
#   hn_ref    : (Bp, Hp)     f32     final hidden state
# ----------------------------------------------------------------------------
def _bidir_gru_layer_kernel(len_ref, gates_ref, whh_ref, bhn_ref,
                            out_ref, hn_ref):
    d = pl.program_id(0)                      # 0 = forward, 1 = backward
    T, Bp, G = gates_ref.shape
    Hp = G // 3

    lens = len_ref[...]                       # (Bp, 1) int32
    whh = whh_ref[...]                        # (Hp, 3Hp), resident in VMEM
    bhn = bhn_ref[d]                          # (1, Hp)

    def step(t, h):
        # forward: time = t ; backward: time = T-1-t  (scalar int arithmetic)
        time = t + d * (T - 1 - 2 * t)
        gx = gates_ref[time]                  # (Bp, 3Hp)
        hh = jnp.dot(h, whh, preferred_element_type=jnp.float32)  # (Bp, 3Hp)
        r = jax.nn.sigmoid(gx[:, :Hp] + hh[:, :Hp])
        z = jax.nn.sigmoid(gx[:, Hp:2 * Hp] + hh[:, Hp:2 * Hp])
        n = jnp.tanh(gx[:, 2 * Hp:] + r * (hh[:, 2 * Hp:] + bhn))
        h_new = n + z * (h - n)               # == (1-z)*n + z*h
        m = (time < lens).astype(jnp.float32)  # (Bp, 1) packed-sequence mask
        out_ref[time] = m * h_new             # padded outputs are zero
        return h + m * (h_new - h)            # padded steps keep previous h

    h0 = jnp.zeros((Bp, Hp), jnp.float32)     # hidden=None -> zero init
    h_final = jax.lax.fori_loop(0, T, step, h0, unroll=min(T, 8))
    hn_ref[...] = h_final                     # written exactly once


# ----------------------------------------------------------------------------
# One bidirectional GRU layer (both directions in a single pallas_call).
# ----------------------------------------------------------------------------
def run_bidir_gru_layer(x, lengths, p_fwd, p_bwd, hidden_size):
    """x: (T, B, In) f32, lengths: (B,) int32.
    Returns out_f, out_b: (T, B, H) and h_f, h_b: (B, H)."""
    T, B, _ = x.shape
    Hp = p_fwd["w_hh_t"].shape[0]             # padded hidden (multiple of 128)
    Bp = _round_up(B, 8)                      # padded batch (sublane multiple)

    # Hoisted input projection: one big MXU-saturating GEMM per direction.
    # r/z biases (b_ih + b_hh) and b_in are folded in here; b_hn cannot be
    # (it sits inside r * (h@W_hn + b_hn)) and is added in-kernel.
    def input_gates(p):
        return jnp.einsum("tbi,ij->tbj", x, p["w_ih_t"]) + p["b_fold"]

    gx = jnp.concatenate([input_gates(p_fwd), input_gates(p_bwd)],
                         axis=0)              # (2T, B, 3Hp), fwd then bwd
    if Bp != B:
        gx = jnp.pad(gx, ((0, 0), (0, Bp - B), (0, 0)))
    lens_p = jnp.zeros((Bp, 1), jnp.int32).at[:B, 0].set(
        lengths.astype(jnp.int32))            # padded rows get length 0

    whh = jnp.concatenate([p_fwd["w_hh_t"], p_bwd["w_hh_t"]], axis=0)  # (2Hp, 3Hp)
    bhn = jnp.stack([p_fwd["b_hn_p"], p_bwd["b_hn_p"]], axis=0)        # (2, 1, Hp)

    # TODO(synk): for long sequences, chunk T (and size chunks against 64 MiB
    # VMEM on v7x) instead of keeping the whole sequence resident.
    grid_spec = pltpu.PrefetchScalarGridSpec(
        num_scalar_prefetch=0,
        grid=(2,),                                            # direction axis
        in_specs=[
            pl.BlockSpec((Bp, 1), lambda d: (0, 0)),          # lengths
            pl.BlockSpec((T, Bp, 3 * Hp), lambda d: (d, 0, 0)),  # gates (per dir)
            pl.BlockSpec((Hp, 3 * Hp), lambda d: (d, 0)),     # W_hh^T (per dir)
            pl.BlockSpec((2, 1, Hp), lambda d: (0, 0, 0)),    # b_hn (both dirs)
        ],
        out_specs=[
            pl.BlockSpec((T, Bp, Hp), lambda d: (d, 0, 0)),   # outputs per dir
            pl.BlockSpec((Bp, Hp), lambda d: (d, 0)),         # h_n per dir
        ],
    )

    out, h_n = pl.pallas_call(
        _bidir_gru_layer_kernel,
        out_shape=(jax.ShapeDtypeStruct((2 * T, Bp, Hp), jnp.float32),
                   jax.ShapeDtypeStruct((2 * Bp, Hp), jnp.float32)),
        grid_spec=grid_spec,
        compiler_params=pltpu.CompilerParams(
            dimension_semantics=("parallel",)),   # fwd/bwd independent: 2 TCs on v7x
    )(lens_p, gx, whh, bhn)

    H = hidden_size
    out_f = out[:T, :B, :H]
    out_b = out[T:2 * T, :B, :H]
    h_f = h_n[:B, :H]
    h_b = h_n[Bp:Bp + B, :H]
    return out_f, out_b, h_f, h_b


# ----------------------------------------------------------------------------
# Parameter construction (PyTorch-style uniform(-1/sqrt(H), 1/sqrt(H))).
# Produces both the fused/padded tensors used by the kernel path and the raw
# split tensors used by the pure-JAX reference.
# ----------------------------------------------------------------------------
def make_direction_params(key, in_size, hidden_size, h_pad):
    H, Hp = hidden_size, h_pad
    k = 1.0 / math.sqrt(H)
    keys = jax.random.split(key, 4)
    w_ih = jax.random.uniform(keys[0], (3 * H, in_size), jnp.float32, -k, k)
    w_hh = jax.random.uniform(keys[1], (3 * H, H), jnp.float32, -k, k)
    b_ih = jax.random.uniform(keys[2], (3 * H,), jnp.float32, -k, k)
    b_hh = jax.random.uniform(keys[3], (3 * H,), jnp.float32, -k, k)

    def split3(a):
        return a[0 * H:1 * H], a[1 * H:2 * H], a[2 * H:3 * H]

    wir, wiz, win = split3(w_ih)
    whr, whz, whn = split3(w_hh)
    bir, biz, bin_ = split3(b_ih)
    bhr, bhz, bhn = split3(b_hh)

    def pad_lane(mat):          # (rows, H) -> (rows, Hp), zero lane padding
        return jnp.pad(mat, ((0, 0), (0, Hp - H)))

    def pad_vec(v):             # (H,) -> (Hp,)
        return jnp.pad(v, (0, Hp - H))

    # Pre-transposed, gate-fused, lane-padded weights.
    w_ih_t = jnp.concatenate([pad_lane(wir.T), pad_lane(wiz.T), pad_lane(win.T)],
                             axis=1)                       # (In, 3Hp)
    w_hh_t = jnp.concatenate([pad_lane(whr.T), pad_lane(whz.T), pad_lane(whn.T)],
                             axis=1)                       # (H, 3Hp)
    w_hh_t = jnp.pad(w_hh_t, ((0, Hp - H), (0, 0)))        # (Hp, 3Hp)
    # Folded biases for the precomputed input gates: r/z get b_ih+b_hh, n gets b_in.
    b_fold = jnp.concatenate([pad_vec(bir + bhr), pad_vec(biz + bhz),
                              pad_vec(bin_)])[None, :]     # (1, 3Hp)
    b_hn_p = pad_vec(bhn)[None, :]                         # (1, Hp)

    return {
        # fused / padded tensors consumed by the Pallas kernel path
        "w_ih_t": w_ih_t, "w_hh_t": w_hh_t, "b_fold": b_fold, "b_hn_p": b_hn_p,
        # raw split tensors used by the pure-JAX reference
        "wir": wir, "wiz": wiz, "win": win,
        "whr": whr, "whz": whz, "whn": whn,
        "br": (bir + bhr)[None, :], "bz": (biz + bhz)[None, :],
        "bin": bin_[None, :], "bhn": bhn[None, :],
    }


# ----------------------------------------------------------------------------
# EncoderRNN.forward
# ----------------------------------------------------------------------------
def encoder_forward(token_ids, input_lengths, emb_table, layer_params,
                    hidden_size):
    """token_ids: (T, B) int32 (lengths descending, as torch pack requires)."""
    x = jnp.take(emb_table, token_ids, axis=0)             # (T, B, E)
    h_finals = []
    out_f = out_b = None
    for (p_fwd, p_bwd) in layer_params:
        out_f, out_b, h_f, h_b = run_bidir_gru_layer(
            x, input_lengths, p_fwd, p_bwd, hidden_size)
        h_finals.extend([h_f, h_b])
        x = jnp.concatenate([out_f, out_b], axis=-1)       # input to next layer
    outputs = out_f + out_b                                # sum of directions
    hidden = jnp.stack(h_finals, axis=0)                   # (n_layers*2, B, H)
    return outputs, hidden


# ----------------------------------------------------------------------------
# Pure-JAX reference (same math, python loop over time) for validation.
# ----------------------------------------------------------------------------
def _ref_gru_direction(x, mask, p, reverse):
    T, B, _ = x.shape
    H = p["whr"].shape[0]
    h = jnp.zeros((B, H), jnp.float32)
    outs = jnp.zeros((T, B, H), jnp.float32)
    order = range(T - 1, -1, -1) if reverse else range(T)
    for t in order:
        xt, m = x[t], mask[t]
        r = jax.nn.sigmoid(xt @ p["wir"].T + h @ p["whr"].T + p["br"])
        z = jax.nn.sigmoid(xt @ p["wiz"].T + h @ p["whz"].T + p["bz"])
        n = jnp.tanh(xt @ p["win"].T + p["bin"] + r * (h @ p["whn"].T + p["bhn"]))
        h_new = (1.0 - z) * n + z * h
        h = m * h_new + (1.0 - m) * h
        outs = outs.at[t].set(m * h_new)
    return outs, h


def _ref_forward(token_ids, input_lengths, emb_table, layer_params):
    T, B = token_ids.shape
    x = jnp.take(emb_table, token_ids, axis=0)
    mask = (jnp.arange(T)[:, None] < input_lengths[None, :]).astype(
        jnp.float32)[:, :, None]
    h_finals = []
    out_f = out_b = None
    for (p_fwd, p_bwd) in layer_params:
        out_f, h_f = _ref_gru_direction(x, mask, p_fwd, reverse=False)
        out_b, h_b = _ref_gru_direction(x, mask, p_bwd, reverse=True)
        h_finals.extend([h_f, h_b])
        x = jnp.concatenate([out_f, out_b], axis=-1)
    return out_f + out_b, jnp.stack(h_finals, axis=0)


if __name__ == "__main__":
    # Small shapes consistent with the module's forward.
    VOCAB, EMB, HIDDEN, N_LAYERS = 20, 32, 32, 2
    T, B = 8, 2
    H_PAD = _round_up(HIDDEN, 128)            # lane-dense padded hidden size

    root = jax.random.PRNGKey(0)
    k_emb, k_tok, *k_layers = jax.random.split(root, 2 + 2 * N_LAYERS)

    # synthetic "fasttext_embeddings"
    emb_table = jax.random.normal(k_emb, (VOCAB, EMB), jnp.float32)

    # token ids (T, B) and descending input_lengths (pack_padded_sequence req.)
    token_ids = jax.random.randint(k_tok, (T, B), 0, VOCAB, dtype=jnp.int32)
    input_lengths = jnp.array([8, 5], dtype=jnp.int32)

    # bidirectional multi-layer GRU parameters
    layer_params = []
    for l in range(N_LAYERS):
        in_size = EMB if l == 0 else 2 * HIDDEN
        kf, kb = jax.random.split(k_layers[l], 2)
        layer_params.append(
            (make_direction_params(kf, in_size, HIDDEN, H_PAD),
             make_direction_params(kb, in_size, HIDDEN, H_PAD)))

    fwd_fn = jax.jit(functools.partial(encoder_forward, hidden_size=HIDDEN))
    outputs, hidden = fwd_fn(token_ids, input_lengths, emb_table, layer_params)
    outputs = jax.block_until_ready(outputs)
    hidden = jax.block_until_ready(hidden)

    # sanity check against a pure-JAX reference
    ref_out, ref_hid = _ref_forward(token_ids, input_lengths, emb_table,
                                    layer_params)
    assert outputs.shape == (T, B, HIDDEN)
    assert hidden.shape == (N_LAYERS * 2, B, HIDDEN)
    assert jnp.allclose(outputs, ref_out, atol=1e-4, rtol=1e-4)
    assert jnp.allclose(hidden, ref_hid, atol=1e-4, rtol=1e-4)

    print("KERNEL_OK")
</pallas_src>

<mosaic_0001>
module attributes {stable_mosaic.version = 11 : i64} {
  func.func @_bidir_gru_layer_kernel(%arg0: i32, %arg1: memref<8x1xi32, #tpu.memory_space<vmem>>, %arg2: memref<8x8x384xf32, #tpu.memory_space<vmem>>, %arg3: memref<128x384xf32, #tpu.memory_space<vmem>>, %arg4: memref<2x1x128xf32, #tpu.memory_space<vmem>>, %arg5: memref<8x8x128xf32, #tpu.memory_space<vmem>>, %arg6: memref<8x128xf32, #tpu.memory_space<vmem>>) attributes {dimension_semantics = [#tpu.dimension_semantics<parallel>], iteration_bounds = array<i64: 2>, scalar_prefetch = 0 : i64, scratch_operands = 0 : i64, tpu.core_type = #tpu.core_type<tc>, window_params = [{pipeline_mode = #tpu.pipeline_mode<synchronous>, transform_indices = @transform_0, window_bounds = array<i64: 8, 1>}, {transform_indices = @transform_1, window_bounds = array<i64: 8, 8, 384>}, {transform_indices = @transform_2, window_bounds = array<i64: 128, 384>}, {pipeline_mode = #tpu.pipeline_mode<synchronous>, transform_indices = @transform_3, window_bounds = array<i64: 2, 1, 128>}, {transform_indices = @transform_4, window_bounds = array<i64: 8, 8, 128>}, {transform_indices = @transform_5, window_bounds = array<i64: 8, 128>}]} {
    %c0 = arith.constant 0 : index
    %c0_0 = arith.constant 0 : index
    %0 = vector.load %arg1[%c0, %c0_0] : memref<8x1xi32, #tpu.memory_space<vmem>>, vector<8x1xi32>
    %c0_1 = arith.constant 0 : index
    %c0_2 = arith.constant 0 : index
    %1 = vector.load %arg3[%c0_1, %c0_2] : memref<128x384xf32, #tpu.memory_space<vmem>>, vector<128x384xf32>
    %2 = arith.index_cast %arg0 : i32 to index
    %c0_3 = arith.constant 0 : index
    %c0_4 = arith.constant 0 : index
    %3 = vector.load %arg4[%2, %c0_3, %c0_4] : memref<2x1x128xf32, #tpu.memory_space<vmem>>, vector<1x1x128xf32>
    %4 = vector.shape_cast %3 : vector<1x1x128xf32> to vector<1x128xf32>
    %cst = arith.constant 0.000000e+00 : f32
    %5 = vector.broadcast %cst : f32 to vector<8x128xf32>
    %c0_i32 = arith.constant 0 : i32
    %c2_i32 = arith.constant 2 : i32
    %6 = arith.muli %c2_i32, %c0_i32 : i32
    %c7_i32 = arith.constant 7 : i32
    %7 = arith.subi %c7_i32, %6 : i32
    %8 = arith.muli %arg0, %7 : i32
    %9 = arith.addi %c0_i32, %8 : i32
    %10 = arith.index_cast %9 : i32 to index
    %c0_5 = arith.constant 0 : index
    %c0_6 = arith.constant 0 : index
    %11 = vector.load %arg2[%10, %c0_5, %c0_6] : memref<8x8x384xf32, #tpu.memory_space<vmem>>, vector<1x8x384xf32>
    %12 = vector.shape_cast %11 : vector<1x8x384xf32> to vector<8x384xf32>
    %cst_7 = arith.constant dense<0.000000e+00> : vector<8x384xf32>
    %13 = tpu.matmul %5, %1, %cst_7 {dimension_numbers = #tpu.dot_dimension_numbers<[1], [0], [0], [1], [0, 0, 1, 1], [], []>} : vector<8x128xf32>, vector<128x384xf32>, vector<8x384xf32> -> vector<8x384xf32>
    %14 = vector.extract_strided_slice %12 {offsets = [0, 0], sizes = [8, 128], strides = [1, 1]} : vector<8x384xf32> to vector<8x128xf32>
    %15 = vector.extract_strided_slice %13 {offsets = [0, 0], sizes = [8, 128], strides = [1, 1]} : vector<8x384xf32> to vector<8x128xf32>
    %16 = arith.addf %14, %15 : vector<8x128xf32>
    %17 = arith.negf %16 : vector<8x128xf32>
    %18 = math.exp %17 : vector<8x128xf32>
    %cst_8 = arith.constant 1.000000e+00 : f32
    %19 = vector.broadcast %cst_8 : f32 to vector<8x128xf32>
    %20 = arith.addf %19, %18 : vector<8x128xf32>
    %21 = arith.divf %19, %20 : vector<8x128xf32>
    %22 = vector.extract_strided_slice %12 {offsets = [0, 128], sizes = [8, 128], strides = [1, 1]} : vector<8x384xf32> to vector<8x128xf32>
    %23 = vector.extract_strided_slice %13 {offsets = [0, 128], sizes = [8, 128], strides = [1, 1]} : vector<8x384xf32> to vector<8x128xf32>
    %24 = arith.addf %22, %23 : vector<8x128xf32>
    %25 = arith.negf %24 : vector<8x128xf32>
    %26 = math.exp %25 : vector<8x128xf32>
    %cst_9 = arith.constant 1.000000e+00 : f32
    %27 = vector.broadcast %cst_9 : f32 to vector<8x128xf32>
    %28 = arith.addf %27, %26 : vector<8x128xf32>
    %29 = arith.divf %27, %28 : vector<8x128xf32>
    %30 = vector.extract_strided_slice %12 {offsets = [0, 256], sizes = [8, 128], strides = [1, 1]} : vector<8x384xf32> to vector<8x128xf32>
    %31 = vector.extract_strided_slice %13 {offsets = [0, 256], sizes = [8, 128], strides = [1, 1]} : vector<8x384xf32> to vector<8x128xf32>
    %32 = vector.broadcast %4 : vector<1x128xf32> to vector<8x128xf32>
    %33 = arith.addf %31, %32 : vector<8x128xf32>
    %34 = arith.mulf %21, %33 : vector<8x128xf32>
    %35 = arith.addf %30, %34 : vector<8x128xf32>
    %36 = math.tanh %35 : vector<8x128xf32>
    %37 = arith.subf %5, %36 : vector<8x128xf32>
    %38 = arith.mulf %29, %37 : vector<8x128xf32>
    %39 = arith.addf %36, %38 : vector<8x128xf32>
    %40 = vector.broadcast %9 : i32 to vector<8x1xi32>
    %41 = arith.cmpi slt, %40, %0 : vector<8x1xi32>
    %42 = arith.extui %41 : vector<8x1xi1> to vector<8x1xi32>
    %43 = arith.sitofp %42 : vector<8x1xi32> to vector<8x1xf32>
    %44 = vector.broadcast %43 : vector<8x1xf32> to vector<8x128xf32>
    %45 = arith.mulf %44, %39 : vector<8x128xf32>
    %46 = arith.index_cast %9 : i32 to index
    %c0_10 = arith.constant 0 : index
    %c0_11 = arith.constant 0 : index
    %47 = vector.load %arg5[%46, %c0_10, %c0_11] : memref<8x8x128xf32, #tpu.memory_space<vmem>>, vector<1x8x128xf32>
    %48 = vector.shape_cast %47 : vector<1x8x128xf32> to vector<8x128xf32>
    %49 = vector.shape_cast %45 : vector<8x128xf32> to vector<1x8x128xf32>
    tpu.vector_store %arg5[%46, %c0_10, %c0_11], %49 {strides = array<i32>} : memref<8x8x128xf32, #tpu.memory_space<vmem>>, vector<1x8x128xf32>,
    %50 = arith.subf %39, %5 : vector<8x128xf32>
    %51 = vector.broadcast %43 : vector<8x1xf32> to vector<8x128xf32>
    %52 = arith.mulf %51, %50 : vector<8x128xf32>
    %53 = arith.addf %5, %52 : vector<8x128xf32>
    %c1_i32 = arith.constant 1 : i32
    %c2_i32_12 = arith.constant 2 : i32
    %54 = arith.muli %c2_i32_12, %c1_i32 : i32
    %c7_i32_13 = arith.constant 7 : i32
    %55 = arith.subi %c7_i32_13, %54 : i32
    %56 = arith.muli %arg0, %55 : i32
    %57 = arith.addi %c1_i32, %56 : i32
    %58 = arith.index_cast %57 : i32 to index
    %c0_14 = arith.constant 0 : index
    %c0_15 = arith.constant 0 : index
    %59 = vector.load %arg2[%58, %c0_14, %c0_15] : memref<8x8x384xf32, #tpu.memory_space<vmem>>, vector<1x8x384xf32>
    %60 = vector.shape_cast %59 : vector<1x8x384xf32> to vector<8x384xf32>
    %cst_16 = arith.constant dense<0.000000e+00> : vector<8x384xf32>
    %61 = tpu.matmul %53, %1, %cst_16 {dimension_numbers = #tpu.dot_dimension_numbers<[1], [0], [0], [1], [0, 0, 1, 1], [], []>} : vector<8x128xf32>, vector<128x384xf32>, vector<8x384xf32> -> vector<8x384xf32>
    %62 = vector.extract_strided_slice %60 {offsets = [0, 0], sizes = [8, 128], strides = [1, 1]} : vector<8x384xf32> to vector<8x128xf32>
    %63 = vector.extract_strided_slice %61 {offsets = [0, 0], sizes = [8, 128], strides = [1, 1]} : vector<8x384xf32> to vector<8x128xf32>
    %64 = arith.addf %62, %63 : vector<8x128xf32>
    %65 = arith.negf %64 : vector<8x128xf32>
    %66 = math.exp %65 : vector<8x128xf32>
    %cst_17 = arith.constant 1.000000e+00 : f32
    %67 = vector.broadcast %cst_17 : f32 to vector<8x128xf32>
    %68 = arith.addf %67, %66 : vector<8x128xf32>
    %69 = arith.divf %67, %68 : vector<8x128xf32>
    %70 = vector.extract_strided_slice %60 {offsets = [0, 128], sizes = [8, 128], strides = [1, 1]} : vector<8x384xf32> to vector<8x128xf32>
    %71 = vector.extract_strided_slice %61 {offsets = [0, 128], sizes = [8, 128], strides = [1, 1]} : vector<8x384xf32> to vector<8x128xf32>
    %72 = arith.addf %70, %71 : vector<8x128xf32>
    %73 = arith.negf %72 : vector<8x128xf32>
    %74 = math.exp %73 : vector<8x128xf32>
    %cst_18 = arith.constant 1.000000e+00 : f32
    %75 = vector.broadcast %cst_18 : f32 to vector<8x128xf32>
    %76 = arith.addf %75, %74 : vector<8x128xf32>
    %77 = arith.divf %75, %76 : vector<8x128xf32>
    %78 = vector.extract_strided_slice %60 {offsets = [0, 256], sizes = [8, 128], strides = [1, 1]} : vector<8x384xf32> to vector<8x128xf32>
    %79 = vector.extract_strided_slice %61 {offsets = [0, 256], sizes = [8, 128], strides = [1, 1]} : vector<8x384xf32> to vector<8x128xf32>
    %80 = vector.broadcast %4 : vector<1x128xf32> to vector<8x128xf32>
    %81 = arith.addf %79, %80 : vector<8x128xf32>
    %82 = arith.mulf %69, %81 : vector<8x128xf32>
    %83 = arith.addf %78, %82 : vector<8x128xf32>
    %84 = math.tanh %83 : vector<8x128xf32>
    %85 = arith.subf %53, %84 : vector<8x128xf32>
    %86 = arith.mulf %77, %85 : vector<8x128xf32>
    %87 = arith.addf %84, %86 : vector<8x128xf32>
    %88 = vector.broadcast %57 : i32 to vector<8x1xi32>
    %89 = arith.cmpi slt, %88, %0 : vector<8x1xi32>
    %90 = arith.extui %89 : vector<8x1xi1> to vector<8x1xi32>
    %91 = arith.sitofp %90 : vector<8x1xi32> to vector<8x1xf32>
    %92 = vector.broadcast %91 : vector<8x1xf32> to vector<8x128xf32>
    %93 = arith.mulf %92, %87 : vector<8x128xf32>
    %94 = arith.index_cast %57 : i32 to index
    %c0_19 = arith.constant 0 : index
    %c0_20 = arith.constant 0 : index
    %95 = vector.load %arg5[%94, %c0_19, %c0_20] : memref<8x8x128xf32, #tpu.memory_space<vmem>>, vector<1x8x128xf32>
    %96 = vector.shape_cast %95 : vector<1x8x128xf32> to vector<8x128xf32>
    %97 = vector.shape_cast %93 : vector<8x128xf32> to vector<1x8x128xf32>
    tpu.vector_store %arg5[%94, %c0_19, %c0_20], %97 {strides = array<i32>} : memref<8x8x128xf32, #tpu.memory_space<vmem>>, vector<1x8x128xf32>,
    %98 = arith.subf %87, %53 : vector<8x128xf32>
    %99 = vector.broadcast %91 : vector<8x1xf32> to vector<8x128xf32>
    %100 = arith.mulf %99, %98 : vector<8x128xf32>
    %101 = arith.addf %53, %100 : vector<8x128xf32>
    %c2_i32_21 = arith.constant 2 : i32
    %c2_i32_22 = arith.constant 2 : i32
    %102 = arith.muli %c2_i32_22, %c2_i32_21 : i32
    %c7_i32_23 = arith.constant 7 : i32
    %103 = arith.subi %c7_i32_23, %102 : i32
    %104 = arith.muli %arg0, %103 : i32
    %105 = arith.addi %c2_i32_21, %104 : i32
    %106 = arith.index_cast %105 : i32 to index
    %c0_24 = arith.constant 0 : index
    %c0_25 = arith.constant 0 : index
    %107 = vector.load %arg2[%106, %c0_24, %c0_25] : memref<8x8x384xf32, #tpu.memory_space<vmem>>, vector<1x8x384xf32>
    %108 = vector.shape_cast %107 : vector<1x8x384xf32> to vector<8x384xf32>
    %cst_26 = arith.constant dense<0.000000e+00> : vector<8x384xf32>
    %109 = tpu.matmul %101, %1, %cst_26 {dimension_numbers = #tpu.dot_dimension_numbers<[1], [0], [0], [1], [0, 0, 1, 1], [], []>} : vector<8x128xf32>, vector<128x384xf32>, vector<8x384xf32> -> vector<8x384xf32>
    %110 = vector.extract_strided_slice %108 {offsets = [0, 0], sizes = [8, 128], strides = [1, 1]} : vector<8x384xf32> to vector<8x128xf32>
    %111 = vector.extract_strided_slice %109 {offsets = [0, 0], sizes = [8, 128], strides = [1, 1]} : vector<8x384xf32> to vector<8x128xf32>
    %112 = arith.addf %110, %111 : vector<8x128xf32>
    %113 = arith.negf %112 : vector<8x128xf32>
    %114 = math.exp %113 : vector<8x128xf32>
    %cst_27 = arith.constant 1.000000e+00 : f32
    %115 = vector.broadcast %cst_27 : f32 to vector<8x128xf32>
    %116 = arith.addf %115, %114 : vector<8x128xf32>
    %117 = arith.divf %115, %116 : vector<8x128xf32>
    %118 = vector.extract_strided_slice %108 {offsets = [0, 128], sizes = [8, 128], strides = [1, 1]} : vector<8x384xf32> to vector<8x128xf32>
    %119 = vector.extract_strided_slice %109 {offsets = [0, 128], sizes = [8, 128], strides = [1, 1]} : vector<8x384xf32> to vector<8x128xf32>
    %120 = arith.addf %118, %119 : vector<8x128xf32>
    %121 = arith.negf %120 : vector<8x128xf32>
    %122 = math.exp %121 : vector<8x128xf32>
    %cst_28 = arith.constant 1.000000e+00 : f32
    %123 = vector.broadcast %cst_28 : f32 to vector<8x128xf32>
    %124 = arith.addf %123, %122 : vector<8x128xf32>
    %125 = arith.divf %123, %124 : vector<8x128xf32>
    %126 = vector.extract_strided_slice %108 {offsets = [0, 256], sizes = [8, 128], strides = [1, 1]} : vector<8x384xf32> to vector<8x128xf32>
    %127 = vector.extract_strided_slice %109 {offsets = [0, 256], sizes = [8, 128], strides = [1, 1]} : vector<8x384xf32> to vector<8x128xf32>
    %128 = vector.broadcast %4 : vector<1x128xf32> to vector<8x128xf32>
    %129 = arith.addf %127, %128 : vector<8x128xf32>
    %130 = arith.mulf %117, %129 : vector<8x128xf32>
    %131 = arith.addf %126, %130 : vector<8x128xf32>
    %132 = math.tanh %131 : vector<8x128xf32>
    %133 = arith.subf %101, %132 : vector<8x128xf32>
    %134 = arith.mulf %125, %133 : vector<8x128xf32>
    %135 = arith.addf %132, %134 : vector<8x128xf32>
    %136 = vector.broadcast %105 : i32 to vector<8x1xi32>
    %137 = arith.cmpi slt, %136, %0 : vector<8x1xi32>
    %138 = arith.extui %137 : vector<8x1xi1> to vector<8x1xi32>
    %139 = arith.sitofp %138 : vector<8x1xi32> to vector<8x1xf32>
    %140 = vector.broadcast %139 : vector<8x1xf32> to vector<8x128xf32>
    %141 = arith.mulf %140, %135 : vector<8x128xf32>
    %142 = arith.index_cast %105 : i32 to index
    %c0_29 = arith.constant 0 : index
    %c0_30 = arith.constant 0 : index
    %143 = vector.load %arg5[%142, %c0_29, %c0_30] : memref<8x8x128xf32, #tpu.memory_space<vmem>>, vector<1x8x128xf32>
    %144 = vector.shape_cast %143 : vector<1x8x128xf32> to vector<8x128xf32>
    %145 = vector.shape_cast %141 : vector<8x128xf32> to vector<1x8x128xf32>
    tpu.vector_store %arg5[%142, %c0_29, %c0_30], %145 {strides = array<i32>} : memref<8x8x128xf32, #tpu.memory_space<vmem>>, vector<1x8x128xf32>,
    %146 = arith.subf %135, %101 : vector<8x128xf32>
    %147 = vector.broadcast %139 : vector<8x1xf32> to vector<8x128xf32>
    %148 = arith.mulf %147, %146 : vector<8x128xf32>
    %149 = arith.addf %101, %148 : vector<8x128xf32>
    %c3_i32 = arith.constant 3 : i32
    %c2_i32_31 = arith.constant 2 : i32
    %150 = arith.muli %c2_i32_31, %c3_i32 : i32
    %c7_i32_32 = arith.constant 7 : i32
    %151 = arith.subi %c7_i32_32, %150 : i32
    %152 = arith.muli %arg0, %151 : i32
    %153 = arith.addi %c3_i32, %152 : i32
    %154 = arith.index_cast %153 : i32 to index
    %c0_33 = arith.constant 0 : index
    %c0_34 = arith.constant 0 : index
    %155 = vector.load %arg2[%154, %c0_33, %c0_34] : memref<8x8x384xf32, #tpu.memory_space<vmem>>, vector<1x8x384xf32>
    %156 = vector.shape_cast %155 : vector<1x8x384xf32> to vector<8x384xf32>
    %cst_35 = arith.constant dense<0.000000e+00> : vector<8x384xf32>
    %157 = tpu.matmul %149, %1, %cst_35 {dimension_numbers = #tpu.dot_dimension_numbers<[1], [0], [0], [1], [0, 0, 1, 1], [], []>} : vector<8x128xf32>, vector<128x384xf32>, vector<8x384xf32> -> vector<8x384xf32>
    %158 = vector.extract_strided_slice %156 {offsets = [0, 0], sizes = [8, 128], strides = [1, 1]} : vector<8x384xf32> to vector<8x128xf32>
    %159 = vector.extract_strided_slice %157 {offsets = [0, 0], sizes = [8, 128], strides = [1, 1]} : vector<8x384xf32> to vector<8x128xf32>
    %160 = arith.addf %158, %159 : vector<8x128xf32>
    %161 = arith.negf %160 : vector<8x128xf32>
    %162 = math.exp %161 : vector<8x128xf32>
    %cst_36 = arith.constant 1.000000e+00 : f32
    %163 = vector.broadcast %cst_36 : f32 to vector<8x128xf32>
    %164 = arith.addf %163, %162 : vector<8x128xf32>
    %165 = arith.divf %163, %164 : vector<8x128xf32>
    %166 = vector.extract_strided_slice %156 {offsets = [0, 128], sizes = [8, 128], strides = [1, 1]} : vector<8x384xf32> to vector<8x128xf32>
    %167 = vector.extract_strided_slice %157 {offsets = [0, 128], sizes = [8, 128], strides = [1, 1]} : vector<8x384xf32> to vector<8x128xf32>
    %168 = arith.addf %166, %167 : vector<8x128xf32>
    %169 = arith.negf %168 : vector<8x128xf32>
    %170 = math.exp %169 : vector<8x128xf32>
    %cst_37 = arith.constant 1.000000e+00 : f32
    %171 = vector.broadcast %cst_37 : f32 to vector<8x128xf32>
    %172 = arith.addf %171, %170 : vector<8x128xf32>
    %173 = arith.divf %171, %172 : vector<8x128xf32>
    %174 = vector.extract_strided_slice %156 {offsets = [0, 256], sizes = [8, 128], strides = [1, 1]} : vector<8x384xf32> to vector<8x128xf32>
    %175 = vector.extract_strided_slice %157 {offsets = [0, 256], sizes = [8, 128], strides = [1, 1]} : vector<8x384xf32> to vector<8x128xf32>
    %176 = vector.broadcast %4 : vector<1x128xf32> to vector<8x128xf32>
    %177 = arith.addf %175, %176 : vector<8x128xf32>
    %178 = arith.mulf %165, %177 : vector<8x128xf32>
    %179 = arith.addf %174, %178 : vector<8x128xf32>
    %180 = math.tanh %179 : vector<8x128xf32>
    %181 = arith.subf %149, %180 : vector<8x128xf32>
    %182 = arith.mulf %173, %181 : vector<8x128xf32>
    %183 = arith.addf %180, %182 : vector<8x128xf32>
    %184 = vector.broadcast %153 : i32 to vector<8x1xi32>
    %185 = arith.cmpi slt, %184, %0 : vector<8x1xi32>
    %186 = arith.extui %185 : vector<8x1xi1> to vector<8x1xi32>
    %187 = arith.sitofp %186 : vector<8x1xi32> to vector<8x1xf32>
    %188 = vector.broadcast %187 : vector<8x1xf32> to vector<8x128xf32>
    %189 = arith.mulf %188, %183 : vector<8x128xf32>
    %190 = arith.index_cast %153 : i32 to index
    %c0_38 = arith.constant 0 : index
    %c0_39 = arith.constant 0 : index
    %191 = vector.load %arg5[%190, %c0_38, %c0_39] : memref<8x8x128xf32, #tpu.memory_space<vmem>>, vector<1x8x128xf32>
    %192 = vector.shape_cast %191 : vector<1x8x128xf32> to vector<8x128xf32>
    %193 = vector.shape_cast %189 : vector<8x128xf32> to vector<1x8x128xf32>
    tpu.vector_store %arg5[%190, %c0_38, %c0_39], %193 {strides = array<i32>} : memref<8x8x128xf32, #tpu.memory_space<vmem>>, vector<1x8x128xf32>,
    %194 = arith.subf %183, %149 : vector<8x128xf32>
    %195 = vector.broadcast %187 : vector<8x1xf32> to vector<8x128xf32>
    %196 = arith.mulf %195, %194 : vector<8x128xf32>
    %197 = arith.addf %149, %196 : vector<8x128xf32>
    %c4_i32 = arith.constant 4 : i32
    %c2_i32_40 = arith.constant 2 : i32
    %198 = arith.muli %c2_i32_40, %c4_i32 : i32
    %c7_i32_41 = arith.constant 7 : i32
    %199 = arith.subi %c7_i32_41, %198 : i32
    %200 = arith.muli %arg0, %199 : i32
    %201 = arith.addi %c4_i32, %200 : i32
    %202 = arith.index_cast %201 : i32 to index
    %c0_42 = arith.constant 0 : index
    %c0_43 = arith.constant 0 : index
    %203 = vector.load %arg2[%202, %c0_42, %c0_43] : memref<8x8x384xf32, #tpu.memory_space<vmem>>, vector<1x8x384xf32>
    %204 = vector.shape_cast %203 : vector<1x8x384xf32> to vector<8x384xf32>
    %cst_44 = arith.constant dense<0.000000e+00> : vector<8x384xf32>
    %205 = tpu.matmul %197, %1, %cst_44 {dimension_numbers = #tpu.dot_dimension_numbers<[1], [0], [0], [1], [0, 0, 1, 1], [], []>} : vector<8x128xf32>, vector<128x384xf32>, vector<8x384xf32> -> vector<8x384xf32>
    %206 = vector.extract_strided_slice %204 {offsets = [0, 0], sizes = [8, 128], strides = [1, 1]} : vector<8x384xf32> to vector<8x128xf32>
    %207 = vector.extract_strided_slice %205 {offsets = [0, 0], sizes = [8, 128], strides = [1, 1]} : vector<8x384xf32> to vector<8x128xf32>
    %208 = arith.addf %206, %207 : vector<8x128xf32>
    %209 = arith.negf %208 : vector<8x128xf32>
    %210 = math.exp %209 : vector<8x128xf32>
    %cst_45 = arith.constant 1.000000e+00 : f32
    %211 = vector.broadcast %cst_45 : f32 to vector<8x128xf32>
    %212 = arith.addf %211, %210 : vector<8x128xf32>
    %213 = arith.divf %211, %212 : vector<8x128xf32>
    %214 = vector.extract_strided_slice %204 {offsets = [0, 128], sizes = [8, 128], strides = [1, 1]} : vector<8x384xf32> to vector<8x128xf32>
    %215 = vector.extract_strided_slice %205 {offsets = [0, 128], sizes = [8, 128], strides = [1, 1]} : vector<8x384xf32> to vector<8x128xf32>
    %216 = arith.addf %214, %215 : vector<8x128xf32>
    %217 = arith.negf %216 : vector<8x128xf32>
    %218 = math.exp %217 : vector<8x128xf32>
    %cst_46 = arith.constant 1.000000e+00 : f32
    %219 = vector.broadcast %cst_46 : f32 to vector<8x128xf32>
    %220 = arith.addf %219, %218 : vector<8x128xf32>
    %221 = arith.divf %219, %220 : vector<8x128xf32>
    %222 = vector.extract_strided_slice %204 {offsets = [0, 256], sizes = [8, 128], strides = [1, 1]} : vector<8x384xf32> to vector<8x128xf32>
    %223 = vector.extract_strided_slice %205 {offsets = [0, 256], sizes = [8, 128], strides = [1, 1]} : vector<8x384xf32> to vector<8x128xf32>
    %224 = vector.broadcast %4 : vector<1x128xf32> to vector<8x128xf32>
    %225 = arith.addf %223, %224 : vector<8x128xf32>
    %226 = arith.mulf %213, %225 : vector<8x128xf32>
    %227 = arith.addf %222, %226 : vector<8x128xf32>
    %228 = math.tanh %227 : vector<8x128xf32>
    %229 = arith.subf %197, %228 : vector<8x128xf32>
    %230 = arith.mulf %221, %229 : vector<8x128xf32>
    %231 = arith.addf %228, %230 : vector<8x128xf32>
    %232 = vector.broadcast %201 : i32 to vector<8x1xi32>
    %233 = arith.cmpi slt, %232, %0 : vector<8x1xi32>
    %234 = arith.extui %233 : vector<8x1xi1> to vector<8x1xi32>
    %235 = arith.sitofp %234 : vector<8x1xi32> to vector<8x1xf32>
    %236 = vector.broadcast %235 : vector<8x1xf32> to vector<8x128xf32>
    %237 = arith.mulf %236, %231 : vector<8x128xf32>
    %238 = arith.index_cast %201 : i32 to index
    %c0_47 = arith.constant 0 : index
    %c0_48 = arith.constant 0 : index
    %239 = vector.load %arg5[%238, %c0_47, %c0_48] : memref<8x8x128xf32, #tpu.memory_space<vmem>>, vector<1x8x128xf32>
    %240 = vector.shape_cast %239 : vector<1x8x128xf32> to vector<8x128xf32>
    %241 = vector.shape_cast %237 : vector<8x128xf32> to vector<1x8x128xf32>
    tpu.vector_store %arg5[%238, %c0_47, %c0_48], %241 {strides = array<i32>} : memref<8x8x128xf32, #tpu.memory_space<vmem>>, vector<1x8x128xf32>,
    %242 = arith.subf %231, %197 : vector<8x128xf32>
    %243 = vector.broadcast %235 : vector<8x1xf32> to vector<8x128xf32>
    %244 = arith.mulf %243, %242 : vector<8x128xf32>
    %245 = arith.addf %197, %244 : vector<8x128xf32>
    %c5_i32 = arith.constant 5 : i32
    %c2_i32_49 = arith.constant 2 : i32
    %246 = arith.muli %c2_i32_49, %c5_i32 : i32
    %c7_i32_50 = arith.constant 7 : i32
    %247 = arith.subi %c7_i32_50, %246 : i32
    %248 = arith.muli %arg0, %247 : i32
    %249 = arith.addi %c5_i32, %248 : i32
    %250 = arith.index_cast %249 : i32 to index
    %c0_51 = arith.constant 0 : index
    %c0_52 = arith.constant 0 : index
    %251 = vector.load %arg2[%250, %c0_51, %c0_52] : memref<8x8x384xf32, #tpu.memory_space<vmem>>, vector<1x8x384xf32>
    %252 = vector.shape_cast %251 : vector<1x8x384xf32> to vector<8x384xf32>
    %cst_53 = arith.constant dense<0.000000e+00> : vector<8x384xf32>
    %253 = tpu.matmul %245, %1, %cst_53 {dimension_numbers = #tpu.dot_dimension_numbers<[1], [0], [0], [1], [0, 0, 1, 1], [], []>} : vector<8x128xf32>, vector<128x384xf32>, vector<8x384xf32> -> vector<8x384xf32>
    %254 = vector.extract_strided_slice %252 {offsets = [0, 0], sizes = [8, 128], strides = [1, 1]} : vector<8x384xf32> to vector<8x128xf32>
    %255 = vector.extract_strided_slice %253 {offsets = [0, 0], sizes = [8, 128], strides = [1, 1]} : vector<8x384xf32> to vector<8x128xf32>
    %256 = arith.addf %254, %255 : vector<8x128xf32>
    %257 = arith.negf %256 : vector<8x128xf32>
    %258 = math.exp %257 : vector<8x128xf32>
    %cst_54 = arith.constant 1.000000e+00 : f32
    %259 = vector.broadcast %cst_54 : f32 to vector<8x128xf32>
    %260 = arith.addf %259, %258 : vector<8x128xf32>
    %261 = arith.divf %259, %260 : vector<8x128xf32>
    %262 = vector.extract_strided_slice %252 {offsets = [0, 128], sizes = [8, 128], strides = [1, 1]} : vector<8x384xf32> to vector<8x128xf32>
    %263 = vector.extract_strided_slice %253 {offsets = [0, 128], sizes = [8, 128], strides = [1, 1]} : vector<8x384xf32> to vector<8x128xf32>
    %264 = arith.addf %262, %263 : vector<8x128xf32>
    %265 = arith.negf %264 : vector<8x128xf32>
    %266 = math.exp %265 : vector<8x128xf32>
    %cst_55 = arith.constant 1.000000e+00 : f32
    %267 = vector.broadcast %cst_55 : f32 to vector<8x128xf32>
    %268 = arith.addf %267, %266 : vector<8x128xf32>
    %269 = arith.divf %267, %268 : vector<8x128xf32>
    %270 = vector.extract_strided_slice %252 {offsets = [0, 256], sizes = [8, 128], strides = [1, 1]} : vector<8x384xf32> to vector<8x128xf32>
    %271 = vector.extract_strided_slice %253 {offsets = [0, 256], sizes = [8, 128], strides = [1, 1]} : vector<8x384xf32> to vector<8x128xf32>
    %272 = vector.broadcast %4 : vector<1x128xf32> to vector<8x128xf32>
    %273 = arith.addf %271, %272 : vector<8x128xf32>
    %274 = arith.mulf %261, %273 : vector<8x128xf32>
    %275 = arith.addf %270, %274 : vector<8x128xf32>
    %276 = math.tanh %275 : vector<8x128xf32>
    %277 = arith.subf %245, %276 : vector<8x128xf32>
    %278 = arith.mulf %269, %277 : vector<8x128xf32>
    %279 = arith.addf %276, %278 : vector<8x128xf32>
    %280 = vector.broadcast %249 : i32 to vector<8x1xi32>
    %281 = arith.cmpi slt, %280, %0 : vector<8x1xi32>
    %282 = arith.extui %281 : vector<8x1xi1> to vector<8x1xi32>
    %283 = arith.sitofp %282 : vector<8x1xi32> to vector<8x1xf32>
    %284 = vector.broadcast %283 : vector<8x1xf32> to vector<8x128xf32>
    %285 = arith.mulf %284, %279 : vector<8x128xf32>
    %286 = arith.index_cast %249 : i32 to index
    %c0_56 = arith.constant 0 : index
    %c0_57 = arith.constant 0 : index
    %287 = vector.load %arg5[%286, %c0_56, %c0_57] : memref<8x8x128xf32, #tpu.memory_space<vmem>>, vector<1x8x128xf32>
    %288 = vector.shape_cast %287 : vector<1x8x128xf32> to vector<8x128xf32>
    %289 = vector.shape_cast %285 : vector<8x128xf32> to vector<1x8x128xf32>
    tpu.vector_store %arg5[%286, %c0_56, %c0_57], %289 {strides = array<i32>} : memref<8x8x128xf32, #tpu.memory_space<vmem>>, vector<1x8x128xf32>,
    %290 = arith.subf %279, %245 : vector<8x128xf32>
    %291 = vector.broadcast %283 : vector<8x1xf32> to vector<8x128xf32>
    %292 = arith.mulf %291, %290 : vector<8x128xf32>
    %293 = arith.addf %245, %292 : vector<8x128xf32>
    %c6_i32 = arith.constant 6 : i32
    %c2_i32_58 = arith.constant 2 : i32
    %294 = arith.muli %c2_i32_58, %c6_i32 : i32
    %c7_i32_59 = arith.constant 7 : i32
    %295 = arith.subi %c7_i32_59, %294 : i32
    %296 = arith.muli %arg0, %295 : i32
    %297 = arith.addi %c6_i32, %296 : i32
    %298 = arith.index_cast %297 : i32 to index
    %c0_60 = arith.constant 0 : index
    %c0_61 = arith.constant 0 : index
    %299 = vector.load %arg2[%298, %c0_60, %c0_61] : memref<8x8x384xf32, #tpu.memory_space<vmem>>, vector<1x8x384xf32>
    %300 = vector.shape_cast %299 : vector<1x8x384xf32> to vector<8x384xf32>
    %cst_62 = arith.constant dense<0.000000e+00> : vector<8x384xf32>
    %301 = tpu.matmul %293, %1, %cst_62 {dimension_numbers = #tpu.dot_dimension_numbers<[1], [0], [0], [1], [0, 0, 1, 1], [], []>} : vector<8x128xf32>, vector<128x384xf32>, vector<8x384xf32> -> vector<8x384xf32>
    %302 = vector.extract_strided_slice %300 {offsets = [0, 0], sizes = [8, 128], strides = [1, 1]} : vector<8x384xf32> to vector<8x128xf32>
    %303 = vector.extract_strided_slice %301 {offsets = [0, 0], sizes = [8, 128], strides = [1, 1]} : vector<8x384xf32> to vector<8x128xf32>
    %304 = arith.addf %302, %303 : vector<8x128xf32>
    %305 = arith.negf %304 : vector<8x128xf32>
    %306 = math.exp %305 : vector<8x128xf32>
    %cst_63 = arith.constant 1.000000e+00 : f32
    %307 = vector.broadcast %cst_63 : f32 to vector<8x128xf32>
    %308 = arith.addf %307, %306 : vector<8x128xf32>
    %309 = arith.divf %307, %308 : vector<8x128xf32>
    %310 = vector.extract_strided_slice %300 {offsets = [0, 128], sizes = [8, 128], strides = [1, 1]} : vector<8x384xf32> to vector<8x128xf32>
    %311 = vector.extract_strided_slice %301 {offsets = [0, 128], sizes = [8, 128], strides = [1, 1]} : vector<8x384xf32> to vector<8x128xf32>
    %312 = arith.addf %310, %311 : vector<8x128xf32>
    %313 = arith.negf %312 : vector<8x128xf32>
    %314 = math.exp %313 : vector<8x128xf32>
    %cst_64 = arith.constant 1.000000e+00 : f32
    %315 = vector.broadcast %cst_64 : f32 to vector<8x128xf32>
    %316 = arith.addf %315, %314 : vector<8x128xf32>
    %317 = arith.divf %315, %316 : vector<8x128xf32>
    %318 = vector.extract_strided_slice %300 {offsets = [0, 256], sizes = [8, 128], strides = [1, 1]} : vector<8x384xf32> to vector<8x128xf32>
    %319 = vector.extract_strided_slice %301 {offsets = [0, 256], sizes = [8, 128], strides = [1, 1]} : vector<8x384xf32> to vector<8x128xf32>
    %320 = vector.broadcast %4 : vector<1x128xf32> to vector<8x128xf32>
    %321 = arith.addf %319, %320 : vector<8x128xf32>
    %322 = arith.mulf %309, %321 : vector<8x128xf32>
    %323 = arith.addf %318, %322 : vector<8x128xf32>
    %324 = math.tanh %323 : vector<8x128xf32>
    %325 = arith.subf %293, %324 : vector<8x128xf32>
    %326 = arith.mulf %317, %325 : vector<8x128xf32>
    %327 = arith.addf %324, %326 : vector<8x128xf32>
    %328 = vector.broadcast %297 : i32 to vector<8x1xi32>
    %329 = arith.cmpi slt, %328, %0 : vector<8x1xi32>
    %330 = arith.extui %329 : vector<8x1xi1> to vector<8x1xi32>
    %331 = arith.sitofp %330 : vector<8x1xi32> to vector<8x1xf32>
    %332 = vector.broadcast %331 : vector<8x1xf32> to vector<8x128xf32>
    %333 = arith.mulf %332, %327 : vector<8x128xf32>
    %334 = arith.index_cast %297 : i32 to index
    %c0_65 = arith.constant 0 : index
    %c0_66 = arith.constant 0 : index
    %335 = vector.load %arg5[%334, %c0_65, %c0_66] : memref<8x8x128xf32, #tpu.memory_space<vmem>>, vector<1x8x128xf32>
    %336 = vector.shape_cast %335 : vector<1x8x128xf32> to vector<8x128xf32>
    %337 = vector.shape_cast %333 : vector<8x128xf32> to vector<1x8x128xf32>
    tpu.vector_store %arg5[%334, %c0_65, %c0_66], %337 {strides = array<i32>} : memref<8x8x128xf32, #tpu.memory_space<vmem>>, vector<1x8x128xf32>,
    %338 = arith.subf %327, %293 : vector<8x128xf32>
    %339 = vector.broadcast %331 : vector<8x1xf32> to vector<8x128xf32>
    %340 = arith.mulf %339, %338 : vector<8x128xf32>
    %341 = arith.addf %293, %340 : vector<8x128xf32>
    %c7_i32_67 = arith.constant 7 : i32
    %c2_i32_68 = arith.constant 2 : i32
    %342 = arith.muli %c2_i32_68, %c7_i32_67 : i32
    %c7_i32_69 = arith.constant 7 : i32
    %343 = arith.subi %c7_i32_69, %342 : i32
    %344 = arith.muli %arg0, %343 : i32
    %345 = arith.addi %c7_i32_67, %344 : i32
    %346 = arith.index_cast %345 : i32 to index
    %c0_70 = arith.constant 0 : index
    %c0_71 = arith.constant 0 : index
    %347 = vector.load %arg2[%346, %c0_70, %c0_71] : memref<8x8x384xf32, #tpu.memory_space<vmem>>, vector<1x8x384xf32>
    %348 = vector.shape_cast %347 : vector<1x8x384xf32> to vector<8x384xf32>
    %cst_72 = arith.constant dense<0.000000e+00> : vector<8x384xf32>
    %349 = tpu.matmul %341, %1, %cst_72 {dimension_numbers = #tpu.dot_dimension_numbers<[1], [0], [0], [1], [0, 0, 1, 1], [], []>} : vector<8x128xf32>, vector<128x384xf32>, vector<8x384xf32> -> vector<8x384xf32>
    %350 = vector.extract_strided_slice %348 {offsets = [0, 0], sizes = [8, 128], strides = [1, 1]} : vector<8x384xf32> to vector<8x128xf32>
    %351 = vector.extract_strided_slice %349 {offsets = [0, 0], sizes = [8, 128], strides = [1, 1]} : vector<8x384xf32> to vector<8x128xf32>
    %352 = arith.addf %350, %351 : vector<8x128xf32>
    %353 = arith.negf %352 : vector<8x128xf32>
    %354 = math.exp %353 : vector<8x128xf32>
    %cst_73 = arith.constant 1.000000e+00 : f32
    %355 = vector.broadcast %cst_73 : f32 to vector<8x128xf32>
    %356 = arith.addf %355, %354 : vector<8x128xf32>
    %357 = arith.divf %355, %356 : vector<8x128xf32>
    %358 = vector.extract_strided_slice %348 {offsets = [0, 128], sizes = [8, 128], strides = [1, 1]} : vector<8x384xf32> to vector<8x128xf32>
    %359 = vector.extract_strided_slice %349 {offsets = [0, 128], sizes = [8, 128], strides = [1, 1]} : vector<8x384xf32> to vector<8x128xf32>
    %360 = arith.addf %358, %359 : vector<8x128xf32>
    %361 = arith.negf %360 : vector<8x128xf32>
    %362 = math.exp %361 : vector<8x128xf32>
    %cst_74 = arith.constant 1.000000e+00 : f32
    %363 = vector.broadcast %cst_74 : f32 to vector<8x128xf32>
    %364 = arith.addf %363, %362 : vector<8x128xf32>
    %365 = arith.divf %363, %364 : vector<8x128xf32>
    %366 = vector.extract_strided_slice %348 {offsets = [0, 256], sizes = [8, 128], strides = [1, 1]} : vector<8x384xf32> to vector<8x128xf32>
    %367 = vector.extract_strided_slice %349 {offsets = [0, 256], sizes = [8, 128], strides = [1, 1]} : vector<8x384xf32> to vector<8x128xf32>
    %368 = vector.broadcast %4 : vector<1x128xf32> to vector<8x128xf32>
    %369 = arith.addf %367, %368 : vector<8x128xf32>
    %370 = arith.mulf %357, %369 : vector<8x128xf32>
    %371 = arith.addf %366, %370 : vector<8x128xf32>
    %372 = math.tanh %371 : vector<8x128xf32>
    %373 = arith.subf %341, %372 : vector<8x128xf32>
    %374 = arith.mulf %365, %373 : vector<8x128xf32>
    %375 = arith.addf %372, %374 : vector<8x128xf32>
    %376 = vector.broadcast %345 : i32 to vector<8x1xi32>
    %377 = arith.cmpi slt, %376, %0 : vector<8x1xi32>
    %378 = arith.extui %377 : vector<8x1xi1> to vector<8x1xi32>
    %379 = arith.sitofp %378 : vector<8x1xi32> to vector<8x1xf32>
    %380 = vector.broadcast %379 : vector<8x1xf32> to vector<8x128xf32>
    %381 = arith.mulf %380, %375 : vector<8x128xf32>
    %382 = arith.index_cast %345 : i32 to index
    %c0_75 = arith.constant 0 : index
    %c0_76 = arith.constant 0 : index
    %383 = vector.load %arg5[%382, %c0_75, %c0_76] : memref<8x8x128xf32, #tpu.memory_space<vmem>>, vector<1x8x128xf32>
    %384 = vector.shape_cast %383 : vector<1x8x128xf32> to vector<8x128xf32>
    %385 = vector.shape_cast %381 : vector<8x128xf32> to vector<1x8x128xf32>
    tpu.vector_store %arg5[%382, %c0_75, %c0_76], %385 {strides = array<i32>} : memref<8x8x128xf32, #tpu.memory_space<vmem>>, vector<1x8x128xf32>,
    %386 = arith.subf %375, %341 : vector<8x128xf32>
    %387 = vector.broadcast %379 : vector<8x1xf32> to vector<8x128xf32>
    %388 = arith.mulf %387, %386 : vector<8x128xf32>
    %389 = arith.addf %341, %388 : vector<8x128xf32>
    %c8_i32 = arith.constant 8 : i32
    %c0_77 = arith.constant 0 : index
    %c0_78 = arith.constant 0 : index
    %390 = vector.load %arg6[%c0_77, %c0_78] : memref<8x128xf32, #tpu.memory_space<vmem>>, vector<8x128xf32>
    tpu.vector_store %arg6[%c0_77, %c0_78], %389 {strides = array<i32>} : memref<8x128xf32, #tpu.memory_space<vmem>>, vector<8x128xf32>,
    return
  }
  func.func @transform_0(%arg0: i32) -> (i32, i32) {
    %c0_i32 = arith.constant 0 : i32
    %c0_i32_0 = arith.constant 0 : i32
    %c0_i32_1 = arith.constant 0 : i32
    return %c0_i32, %c0_i32_0 : i32, i32
  }
  func.func @transform_1(%arg0: i32) -> (i32, i32, i32) {
    %c0_i32 = arith.constant 0 : i32
    %c0_i32_0 = arith.constant 0 : i32
    %c0_i32_1 = arith.constant 0 : i32
    return %arg0, %c0_i32, %c0_i32_0 : i32, i32, i32
  }
  func.func @transform_2(%arg0: i32) -> (i32, i32) {
    %c0_i32 = arith.constant 0 : i32
    %c0_i32_0 = arith.constant 0 : i32
    return %arg0, %c0_i32 : i32, i32
  }
  func.func @transform_3(%arg0: i32) -> (i32, i32, i32) {
    %c0_i32 = arith.constant 0 : i32
    %c0_i32_0 = arith.constant 0 : i32
    %c0_i32_1 = arith.constant 0 : i32
    %c0_i32_2 = arith.constant 0 : i32
    return %c0_i32, %c0_i32_0, %c0_i32_1 : i32, i32, i32
  }
  func.func @transform_4(%arg0: i32) -> (i32, i32, i32) {
    %c0_i32 = arith.constant 0 : i32
    %c0_i32_0 = arith.constant 0 : i32
    %c0_i32_1 = arith.constant 0 : i32
    return %arg0, %c0_i32, %c0_i32_0 : i32, i32, i32
  }
  func.func @transform_5(%arg0: i32) -> (i32, i32) {
    %c0_i32 = arith.constant 0 : i32
    %c0_i32_0 = arith.constant 0 : i32
    return %arg0, %c0_i32 : i32, i32
  }
}

</mosaic_0001>

<llo_original>
// kernel: encoder_forward.2
$region0: #{encoder_forward.2}
  #allocation0 [shape = 'u32[]', space=smem, size = 0x4, offset = 0x4, fixed_abs, tag = 'smem constant byte address 0x4 - core index']
  #allocation1 [shape = 'u32[144,128]{1,0:T(1,128)}', space=vmem, size = 0x12000, scoped, tag = 'internal scratch']
  %s0 = inlined_call_operand.vmem [shape: s32[8,1], index: 0, kind: input, shape index: {}]
  %s1 = inlined_call_operand.vmem [shape: f32[16,8,384], index: 1, kind: input, shape index: {}]
  %s2 = inlined_call_operand.vmem [shape: f32[256,384], index: 2, kind: input, shape index: {}]
  %s3 = inlined_call_operand.vmem [shape: f32[2,1,128], index: 3, kind: input, shape index: {}]
  %s4 = inlined_call_operand.vmem [shape: f32[16,8,128], index: 4, kind: output, shape index: {0}]
  %s5 = inlined_call_operand.vmem [shape: f32[16,128], index: 5, kind: output, shape index: {1}]
  %6 = xla_tuple %s4, %s5
  %s7 = sld [smem:[#allocation0]]
  $region57: #{encoder_forward.2} parent=0
    _
  %s9 = ssub.s32 1, %s7
  %s10 = scalar_select 0, %s9, %s7
  loop: start=0, step=1, limit=4
  $region2: #{encoder_forward.2} parent=0 // loop_pre_header
    _
  $region3: #{encoder_forward.2} parent=0 // loop_header
    %s12 = sphi 0, %s16
    %p13 = scmp.ge.s32.totalorder %s12, 4
    %s20 = sphi 0, %s20
    %s22 = sphi 0, %s20
    %s23 = sphi 0, %s22
    %s37 = sphi 0, %s23
    %s43 = sphi 0, %s45
    %s46 = sphi 0, %s43
    %s47 = sphi 0, %s46
    %s63 = sphi 0, %s47
    %s69 = sphi 0, %s71
    %s72 = sphi 0, %s69
    %s73 = sphi 0, %s72
    %s89 = sphi 0, %s73
    %s93 = sphi 0, %s93
    %s95 = sphi 0, %s93
    %s96 = sphi 0, %s95
    %s110 = sphi 0, %s96
    %s116 = sphi 0, %s118
    %s119 = sphi 0, %s116
    %s120 = sphi 0, %s119
    %s136 = sphi 0, %s120
    %s142 = sphi 0, %s144
    %s145 = sphi 0, %s142
    %s146 = sphi 0, %s145
    %s162 = sphi 0, %s146
  $region4: #{encoder_forward.2} parent=0 // loop_header_branch
    %15 = sbr.rel (%p13) target = $region8
  $region5: #{encoder_forward.2} parent=0 // loop_body
    %s17 = ssub.s32 %s12, 1
    %s18 = ssub.s32 %s12, 2
    %s19 = sadd.s32 %s12, 1
    %s21 = sadd.s32 %s20, 1
    %p24 = scmp.eq.s32.totalorder %s12, 1
    %p25 = scmp.ne.s32.totalorder %s20, %s22
    %p26 = scmp.eq.s32.totalorder %s12, 0
    %p27 = por %p25, %p26
    %p28 = scmp.ne.s32.totalorder %s20, %s22
    %p29 = scmp.eq.s32.totalorder %s17, 1
    %p30 = por %p28, %p29
    %p31 = scmp.ne.s32.totalorder %s22, %s23
    %p32 = scmp.eq.s32.totalorder %s17, 0
    %p33 = por %p31, %p32
    %p34 = scmp.ne.s32.totalorder %s22, %s23
    %p35 = scmp.eq.s32.totalorder %s18, 1
    %p36 = por %p34, %p35
    %p38 = scmp.ne.s32.totalorder %s23, %s37
    %p39 = scmp.eq.s32.totalorder %s18, 0
    %p40 = por %p38, %p39
    %s41 = ssub.s32 %s12, %s19
    %p42 = scmp.eq.s32.totalorder %s41, 0
    %s44 = sadd.s32 %s43, 1
    %s45 = scalar_select %p42, %s43, %s44
    %p48 = pneg %p42
    %p49 = scmp.eq.s32.totalorder %s12, 1
    %p50 = por %p48, %p49
    %p51 = scmp.ne.s32.totalorder %s43, %s46
    %p52 = scmp.eq.s32.totalorder %s12, 0
    %p53 = por %p51, %p52
    %p54 = scmp.ne.s32.totalorder %s43, %s46
    %p55 = scmp.eq.s32.totalorder %s17, 1
    %p56 = por %p54, %p55
    %p57 = scmp.ne.s32.totalorder %s46, %s47
    %p58 = scmp.eq.s32.totalorder %s17, 0
    %p59 = por %p57, %p58
    %p60 = scmp.ne.s32.totalorder %s46, %s47
    %p61 = scmp.eq.s32.totalorder %s18, 1
    %p62 = por %p60, %p61
    %p64 = scmp.ne.s32.totalorder %s47, %s63
    %p65 = scmp.eq.s32.totalorder %s18, 0
    %p66 = por %p64, %p65
    %s67 = ssub.s32 %s12, %s19
    %p68 = scmp.eq.s32.totalorder %s67, 0
    %s70 = sadd.s32 %s69, 1
    %s71 = scalar_select %p68, %s69, %s70
    %p74 = pneg %p68
    %p75 = scmp.eq.s32.totalorder %s12, 1
    %p76 = por %p74, %p75
    %p77 = scmp.ne.s32.totalorder %s69, %s72
    %p78 = scmp.eq.s32.totalorder %s12, 0
    %p79 = por %p77, %p78
    %p80 = scmp.ne.s32.totalorder %s69, %s72
    %p81 = scmp.eq.s32.totalorder %s17, 1
    %p82 = por %p80, %p81
    %p83 = scmp.ne.s32.totalorder %s72, %s73
    %p84 = scmp.eq.s32.totalorder %s17, 0
    %p85 = por %p83, %p84
    %p86 = scmp.ne.s32.totalorder %s72, %s73
    %p87 = scmp.eq.s32.totalorder %s18, 1
    %p88 = por %p86, %p87
    %p90 = scmp.ne.s32.totalorder %s73, %s89
    %p91 = scmp.eq.s32.totalorder %s18, 0
    %p92 = por %p90, %p91
    %s94 = sadd.s32 %s93, 1
    %p97 = scmp.eq.s32.totalorder %s12, 1
    %p98 = scmp.ne.s32.totalorder %s93, %s95
    %p99 = scmp.eq.s32.totalorder %s12, 0
    %p100 = por %p98, %p99
    %p101 = scmp.ne.s32.totalorder %s93, %s95
    %p102 = scmp.eq.s32.totalorder %s17, 1
    %p103 = por %p101, %p102
    %p104 = scmp.ne.s32.totalorder %s95, %s96
    %p105 = scmp.eq.s32.totalorder %s17, 0
    %p106 = por %p104, %p105
    %p107 = scmp.ne.s32.totalorder %s95, %s96
    %p108 = scmp.eq.s32.totalorder %s18, 1
    %p109 = por %p107, %p108
    %p111 = scmp.ne.s32.totalorder %s96, %s110
    %p112 = scmp.eq.s32.totalorder %s18, 0
    %p113 = por %p111, %p112
    %s114 = ssub.s32 %s12, %s19
    %p115 = scmp.eq.s32.totalorder %s114, 0
    %s117 = sadd.s32 %s116, 1
    %s118 = scalar_select %p115, %s116, %s117
    %p121 = pneg %p115
    %p122 = scmp.eq.s32.totalorder %s12, 1
    %p123 = por %p121, %p122
    %p124 = scmp.ne.s32.totalorder %s116, %s119
    %p125 = scmp.eq.s32.totalorder %s12, 0
    %p126 = por %p124, %p125
    %p127 = scmp.ne.s32.totalorder %s116, %s119
    %p128 = scmp.eq.s32.totalorder %s17, 1
    %p129 = por %p127, %p128
    %p130 = scmp.ne.s32.totalorder %s119, %s120
    %p131 = scmp.eq.s32.totalorder %s17, 0
    %p132 = por %p130, %p131
    %p133 = scmp.ne.s32.totalorder %s119, %s120
    %p134 = scmp.eq.s32.totalorder %s18, 1
    %p135 = por %p133, %p134
    %p137 = scmp.ne.s32.totalorder %s120, %s136
    %p138 = scmp.eq.s32.totalorder %s18, 0
    %p139 = por %p137, %p138
    %s140 = ssub.s32 %s12, %s19
    %p141 = scmp.eq.s32.totalorder %s140, 0
    %s143 = sadd.s32 %s142, 1
    %s144 = scalar_select %p141, %s142, %s143
    %p147 = pneg %p141
    %p148 = scmp.eq.s32.totalorder %s12, 1
    %p149 = por %p147, %p148
    %p150 = scmp.ne.s32.totalorder %s142, %s145
    %p151 = scmp.eq.s32.totalorder %s12, 0
    %p152 = por %p150, %p151
    %p153 = scmp.ne.s32.totalorder %s142, %s145
    %p154 = scmp.eq.s32.totalorder %s17, 1
    %p155 = por %p153, %p154
    %p156 = scmp.ne.s32.totalorder %s145, %s146
    %p157 = scmp.eq.s32.totalorder %s17, 0
    %p158 = por %p156, %p157
    %p159 = scmp.ne.s32.totalorder %s145, %s146
    %p160 = scmp.eq.s32.totalorder %s18, 1
    %p161 = por %p159, %p160
    %p163 = scmp.ne.s32.totalorder %s146, %s162
    %p164 = scmp.eq.s32.totalorder %s18, 0
    %p165 = por %p163, %p164
    %p166 = scmp.le.s32.totalorder 1, %s12
    %p167 = scmp.lt.s32.totalorder %s12, 3
    %p168 = pnand %p166, %p167
    %p169 = pneg %p168
    // Predicated region
    $region9: #{encoder_forward.2} parent=5 // pred_check
      _
    $region10: #{encoder_forward.2} parent=5 // pred_check_branch
      %171 = sbr.rel (%p168) target = $region12
    $region11: #{encoder_forward.2} parent=5 // pred_region
      %s172 = ssub.s32 %s12, 1
      // Predicated region
      $region13: #{encoder_forward.2} parent=11 // pred_check
        %p173 = pneg %p33
      $region14: #{encoder_forward.2} parent=11 // pred_check_branch
        %175 = sbr.rel (%p173) target = $region16
      $region15: #{encoder_forward.2} parent=11 // pred_region
        _
      $region16: #{encoder_forward.2} parent=11 // pred_fallthru
        _
      // Predicated region
      $region17: #{encoder_forward.2} parent=11 // pred_check
        %p176 = pneg %p106
      $region18: #{encoder_forward.2} parent=11 // pred_check_branch
        %178 = sbr.rel (%p176) target = $region20
      $region19: #{encoder_forward.2} parent=11 // pred_region
        _
      $region20: #{encoder_forward.2} parent=11 // pred_fallthru
        _
    $region12: #{encoder_forward.2} parent=5 // pred_fallthru
      _
    %p179 = scmp.lt.s32.totalorder %s12, 2
    // Predicated region
    $region21: #{encoder_forward.2} parent=5 // pred_check
      %p180 = pneg %p179
    $region22: #{encoder_forward.2} parent=5 // pred_check_branch
      %182 = sbr.rel (%p180) target = $region24
    $region23: #{encoder_forward.2} parent=5 // pred_region
      // Predicated region
      $region25: #{encoder_forward.2} parent=23 // pred_check
        %p183 = pneg %p53
      $region26: #{encoder_forward.2} parent=23 // pred_check_branch
        %185 = sbr.rel (%p183) target = $region28
      $region27: #{encoder_forward.2} parent=23 // pred_region
        %s186 = smul.u32 8, %s12
        %p187 = scmp.lt.s32.totalorder %s186, 15
        %s188 = scalar_select %p187, %s186, 15
        %s189 = smul.addr %s188, 3
        %s190 = smul.addr %s189, 8
        %s191 = scalar_lea.vmem %s1, %s190
        %s192 = smul.u32 8, %s12
      $region28: #{encoder_forward.2} parent=23 // pred_fallthru
        _
      // Predicated region
      $region29: #{encoder_forward.2} parent=23 // pred_check
        %p193 = pneg %p79
      $region30: #{encoder_forward.2} parent=23 // pred_check_branch
        %195 = sbr.rel (%p193) target = $region32
      $region31: #{encoder_forward.2} parent=23 // pred_region
        %s196 = smul.u32 16, %s12
        %p197 = scmp.lt.s32.totalorder %s196, 31
        %s198 = scalar_select %p197, %s196, 31
        %s199 = smul.addr %s198, 3
        %s200 = smul.addr %s199, 8
        %s201 = scalar_lea.vmem %s2, %s200
        %s202 = smul.u32 16, %s12
      $region32: #{encoder_forward.2} parent=23 // pred_fallthru
        _
    $region24: #{encoder_forward.2} parent=5 // pred_fallthru
      _
    %p203 = scmp.le.s32.totalorder 1, %s12
    %p204 = scmp.lt.s32.totalorder %s12, 3
    %p205 = pnand %p203, %p204
    %p206 = pneg %p205
    // Predicated region
    $region33: #{encoder_forward.2} parent=5 // pred_check
      _
    $region34: #{encoder_forward.2} parent=5 // pred_check_branch
      %208 = sbr.rel (%p205) target = $region36
    $region35: #{encoder_forward.2} parent=5 // pred_region
      %s209 = ssub.s32 %s12, 1
      %p210 = pneg %p33
      %p211 = pneg %p30
      %s212 = smul.u32 8, %s17
      %p213 = scmp.lt.s32.totalorder %s212, 15
      %s214 = scalar_select %p213, %s212, 15
      %s215 = smul.addr %s214, 3
      %s216 = smul.addr %s215, 8
      %s217 = scalar_lea.vmem %s1, %s216
      %p218 = pneg %p59
      %p219 = pneg %p56
      %s220 = smul.u32 16, %s17
      %p221 = scmp.lt.s32.totalorder %s220, 31
      %s222 = scalar_select %p221, %s220, 31
      %s223 = smul.addr %s222, 3
      %s224 = smul.addr %s223, 8
      %s225 = scalar_lea.vmem %s2, %s224
      %p226 = pneg %p85
      %p227 = pneg %p82
      %p228 = pneg %p106
      %p229 = pneg %p103
      %p230 = pneg %p132
      %p231 = pneg %p129
      %s232 = smul.u32 8, %s17
      %p233 = scmp.lt.s32.totalorder %s232, 15
      %s234 = scalar_select %p233, %s232, 15
      %s235 = smul.addr %s234, 8
      %s236 = scalar_lea.vmem %s4, %s235
      %p237 = pneg %p158
      %p238 = pneg %p155
      %p239 = scmp.lt.s32.totalorder %s17, 1
      %s240 = scalar_select %p239, %s17, 1
      %s241 = smul.addr %s240, 8
      %s242 = scalar_lea.vmem %s5, %s241
      %s243 = smul.u32 8, %s17
      %p244 = scmp.lt.s32.totalorder %s243, 15
      %s245 = scalar_select %p244, %s243, 15
      %s246 = smul.addr %s245, 3
      %s247 = smul.addr %s246, 8
      %s248 = scalar_lea.vmem %s1, %s247
      %s249 = smul.u32 8, %s17
      %s250 = smul.u32 16, %s17
      %p251 = scmp.lt.s32.totalorder %s250, 31
      %s252 = scalar_select %p251, %s250, 31
      %s253 = smul.addr %s252, 3
      %s254 = smul.addr %s253, 8
      %s255 = scalar_lea.vmem %s2, %s254
      %s256 = smul.u32 16, %s17
      %s257 = smul.u32 8, %s17
      %p258 = scmp.lt.s32.totalorder %s257, 15
      %s259 = scalar_select %p258, %s257, 15
      %s260 = smul.addr %s259, 8
      %s261 = scalar_lea.vmem %s4, %s260
      %s262 = smul.u32 8, %s17
      %p263 = scmp.lt.s32.totalorder %s17, 1
      %s264 = scalar_select %p263, %s17, 1
      %s265 = smul.addr %s264, 8
      %s266 = scalar_lea.vmem %s5, %s265
      %v267 = vld [vmem:[%s0] sm:$0xff]
      %v268 = vld [vmem:[%s255] sm:$0xff]
      %v269 = vld [vmem:[%s255 + $0x8] sm:$0xff]
      %v270 = vld [vmem:[%s255 + $0x10] sm:$0xff]
      %v271 = vld [vmem:[%s255 + $0x18] sm:$0xff]
      %v272 = vld [vmem:[%s255 + $0x20] sm:$0xff]
      %v273 = vld [vmem:[%s255 + $0x28] sm:$0xff]
      %v274 = vld [vmem:[%s255 + $0x30] sm:$0xff]
      %v275 = vld [vmem:[%s255 + $0x38] sm:$0xff]
      %v276 = vld [vmem:[%s255 + $0x40] sm:$0xff]
      %v277 = vld [vmem:[%s255 + $0x48] sm:$0xff]
      %v278 = vld [vmem:[%s255 + $0x50] sm:$0xff]
      %v279 = vld [vmem:[%s255 + $0x58] sm:$0xff]
      %v280 = vld [vmem:[%s255 + $0x60] sm:$0xff]
      %v281 = vld [vmem:[%s255 + $0x68] sm:$0xff]
      %v282 = vld [vmem:[%s255 + $0x70] sm:$0xff]
      %v283 = vld [vmem:[%s255 + $0x78] sm:$0xff]
      %v284 = vld [vmem:[%s255 + $0x80] sm:$0xff]
      %v285 = vld [vmem:[%s255 + $0x88] sm:$0xff]
      %v286 = vld [vmem:[%s255 + $0x90] sm:$0xff]
      %v287 = vld [vmem:[%s255 + $0x98] sm:$0xff]
      %v288 = vld [vmem:[%s255 + $0xa0] sm:$0xff]
      %v289 = vld [vmem:[%s255 + $0xa8] sm:$0xff]
      %v290 = vld [vmem:[%s255 + $0xb0] sm:$0xff]
      %v291 = vld [vmem:[%s255 + $0xb8] sm:$0xff]
      %v292 = vld [vmem:[%s255 + $0xc0] sm:$0xff]
      %v293 = vld [vmem:[%s255 + $0xc8] sm:$0xff]
      %v294 = vld [vmem:[%s255 + $0xd0] sm:$0xff]
      %v295 = vld [vmem:[%s255 + $0xd8] sm:$0xff]
      %v296 = vld [vmem:[%s255 + $0xe0] sm:$0xff]
      %v297 = vld [vmem:[%s255 + $0xe8] sm:$0xff]
      %v298 = vld [vmem:[%s255 + $0xf0] sm:$0xff]
      %v299 = vld [vmem:[%s255 + $0xf8] sm:$0xff]
      %v300 = vld [vmem:[%s255 + $0x100] sm:$0xff]
      %v301 = vld [vmem:[%s255 + $0x108] sm:$0xff]
      %v302 = vld [vmem:[%s255 + $0x110] sm:$0xff]
      %v303 = vld [vmem:[%s255 + $0x118] sm:$0xff]
      %v304 = vld [vmem:[%s255 + $0x120] sm:$0xff]
      %v305 = vld [vmem:[%s255 + $0x128] sm:$0xff]
      %v306 = vld [vmem:[%s255 + $0x130] sm:$0xff]
      %v307 = vld [vmem:[%s255 + $0x138] sm:$0xff]
      %v308 = vld [vmem:[%s255 + $0x140] sm:$0xff]
      %v309 = vld [vmem:[%s255 + $0x148] sm:$0xff]
      %v310 = vld [vmem:[%s255 + $0x150] sm:$0xff]
      %v311 = vld [vmem:[%s255 + $0x158] sm:$0xff]
      %v312 = vld [vmem:[%s255 + $0x160] sm:$0xff]
      %v313 = vld [vmem:[%s255 + $0x168] sm:$0xff]
      %v314 = vld [vmem:[%s255 + $0x170] sm:$0xff]
      %v315 = vld [vmem:[%s255 + $0x178] sm:$0xff]
      %s316 = scalar_lea.vmem %s3, %s17
      %v317 = vld [vmem:[%s316] sm:$0x1]
      %s318 = smul.u32 %s17, 7
      %s319 = smul.u32 %s318, 3
      %s320 = smul.addr %s319, 8
      %s321 = scalar_lea.vmem %s248, %s320
      %v322 = vld [vmem:[%s321] sm:$0xff]
      %v323 = vld [vmem:[%s321 + $0x8] sm:$0xff]
      %v324 = vld [vmem:[%s321 + $0x10] sm:$0xff]
      %325 = vmatprep.subr.mxu0 %v269
      %326 = vmatpush1.msra.mxu0 %v268
      %327 = vmatprep.subr.mxu0 %v272
      %328 = vmatpush1.msra.mxu0 %v271
      %329 = vmatprep.subr.mxu0 %v275
      %330 = vmatpush1.msra.mxu0 %v274
      %331 = vmatprep.subr.mxu0 %v278
      %332 = vmatpush1.msra.mxu0 %v277
      %333 = vmatprep.subr.mxu0 %v281
      %334 = vmatpush1.msra.mxu0 %v280
      %335 = vmatprep.subr.mxu0 %v284
      %336 = vmatpush1.msra.mxu0 %v283
      %337 = vmatprep.subr.mxu0 %v287
      %338 = vmatpush1.msra.mxu0 %v286
      %339 = vmatprep.subr.mxu0 %v290
      %340 = vmatpush1.msra.mxu0 %v289
      %341 = vmatprep.subr.mxu0 %v293
      %342 = vmatpush1.msra.mxu0 %v292
      %343 = vmatprep.subr.mxu0 %v296
      %344 = vmatpush1.msra.mxu0 %v295
      %345 = vmatprep.subr.mxu0 %v299
      %346 = vmatpush1.msra.mxu0 %v298
      %347 = vmatprep.subr.mxu0 %v302
      %348 = vmatpush1.msra.mxu0 %v301
      %349 = vmatprep.subr.mxu0 %v305
      %350 = vmatpush1.msra.mxu0 %v304
      %351 = vmatprep.subr.mxu0 %v308
      %352 = vmatpush1.msra.mxu0 %v307
      %353 = vmatprep.subr.mxu0 %v311
      %354 = vmatpush1.msra.mxu0 %v310
      %355 = vmatprep.subr.mxu0 %v314
      %356 = vmatpush1.msra.mxu0 %v313
      %357 = vmatprep.subr.mxu0 0.0
      %358 = vmatpush1.msra.mxu0 0.0
      %359 = vmatprep.subr.mxu0 0.0
      %360 = vmatpush1.msra.mxu0 0.0
      %361 = vmatprep.subr.mxu0 0.0
      %362 = vmatpush1.msra.mxu0 0.0
      %363 = vmatprep.subr.mxu0 0.0
      %364 = vmatpush1.msra.mxu0 0.0
      %365 = vmatprep.subr.mxu0 0.0
      %366 = vmatpush1.msra.mxu0 0.0
      %367 = vmatprep.subr.mxu0 0.0
      %368 = vmatpush1.msra.mxu0 0.0
      %369 = vmatprep.subr.mxu0 0.0
      %370 = vmatpush1.msra.mxu0 0.0
      %371 = vmatprep.subr.mxu0 0.0
      %372 = vmatpush1.msra.mxu0 0.0
      %373 = vmatprep.subr.mxu0 0.0
      %374 = vmatpush1.msra.mxu0 0.0
      %375 = vmatprep.subr.mxu0 0.0
      %376 = vmatpush1.msra.mxu0 0.0
      %377 = vmatprep.subr.mxu0 0.0
      %378 = vmatpush1.msra.mxu0 0.0
      %379 = vmatprep.subr.mxu0 0.0
      %380 = vmatpush1.msra.mxu0 0.0
      %381 = vmatprep.subr.mxu0 0.0
      %382 = vmatpush1.msra.mxu0 0.0
      %383 = vmatprep.subr.mxu0 0.0
      %384 = vmatpush1.msra.mxu0 0.0
      %385 = vmatprep.subr.mxu0 0.0
      %386 = vmatpush1.msra.mxu0 0.0
      %387 = vmatprep.subr.mxu0 0.0
      %388 = vmatpush1.msra.mxu0 0.0
      %389 = vmatprep.mubr.f32.mxu0 0.0
      %390 = vmatmul.mubr.f32.gmra.mrb[0].mxu0 0.0
      %v391 = vpop.f32.mrb[0].mxu0
      %v392 = vadd.f32 0.0, %v391
      %v393 = vpop.f32.mrb[0].mxu0
      %v394 = vadd.f32 0.0, %v393
      %395 = vdwg.mxu0
      %396 = vmatprep.subr.mxu0 0.0
      %397 = vmatpush1.msra.mxu0 %v270
      %398 = vmatprep.subr.mxu0 0.0
      %399 = vmatpush1.msra.mxu0 %v273
      %400 = vmatprep.subr.mxu0 0.0
      %401 = vmatpush1.msra.mxu0 %v276
      %402 = vmatprep.subr.mxu0 0.0
      %403 = vmatpush1.msra.mxu0 %v279
      %404 = vmatprep.subr.mxu0 0.0
      %405 = vmatpush1.msra.mxu0 %v282
      %406 = vmatprep.subr.mxu0 0.0
      %407 = vmatpush1.msra.mxu0 %v285
      %408 = vmatprep.subr.mxu0 0.0
      %409 = vmatpush1.msra.mxu0 %v288
      %410 = vmatprep.subr.mxu0 0.0
      %411 = vmatpush1.msra.mxu0 %v291
      %412 = vmatprep.subr.mxu0 0.0
      %413 = vmatpush1.msra.mxu0 %v294
      %414 = vmatprep.subr.mxu0 0.0
      %415 = vmatpush1.msra.mxu0 %v297
      %416 = vmatprep.subr.mxu0 0.0
      %417 = vmatpush1.msra.mxu0 %v300
      %418 = vmatprep.subr.mxu0 0.0
      %419 = vmatpush1.msra.mxu0 %v303
      %420 = vmatprep.subr.mxu0 0.0
      %421 = vmatpush1.msra.mxu0 %v306
      %422 = vmatprep.subr.mxu0 0.0
      %423 = vmatpush1.msra.mxu0 %v309
      %424 = vmatprep.subr.mxu0 0.0
      %425 = vmatpush1.msra.mxu0 %v312
      %426 = vmatprep.subr.mxu0 0.0
      %427 = vmatpush1.msra.mxu0 %v315
      %428 = vmatprep.subr.mxu0 0.0
      %429 = vmatpush1.msra.mxu0 0.0
      %430 = vmatprep.subr.mxu0 0.0
      %431 = vmatpush1.msra.mxu0 0.0
      %432 = vmatprep.subr.mxu0 0.0
      %433 = vmatpush1.msra.mxu0 0.0
      %434 = vmatprep.subr.mxu0 0.0
      %435 = vmatpush1.msra.mxu0 0.0
      %436 = vmatprep.subr.mxu0 0.0
      %437 = vmatpush1.msra.mxu0 0.0
      %438 = vmatprep.subr.mxu0 0.0
      %439 = vmatpush1.msra.mxu0 0.0
      %440 = vmatprep.subr.mxu0 0.0
      %441 = vmatpush1.msra.mxu0 0.0
      %442 = vmatprep.subr.mxu0 0.0
      %443 = vmatpush1.msra.mxu0 0.0
      %444 = vmatprep.subr.mxu0 0.0
      %445 = vmatpush1.msra.mxu0 0.0
      %446 = vmatprep.subr.mxu0 0.0
      %447 = vmatpush1.msra.mxu0 0.0
      %448 = vmatprep.subr.mxu0 0.0
      %449 = vmatpush1.msra.mxu0 0.0
      %450 = vmatprep.subr.mxu0 0.0
      %451 = vmatpush1.msra.mxu0 0.0
      %452 = vmatprep.subr.mxu0 0.0
      %453 = vmatpush1.msra.mxu0 0.0
      %454 = vmatprep.subr.mxu0 0.0
      %455 = vmatpush1.msra.mxu0 0.0
      %456 = vmatprep.subr.mxu0 0.0
      %457 = vmatpush1.msra.mxu0 0.0
      %458 = vmatprep.subr.mxu0 0.0
      %459 = vmatpush1.msra.mxu0 0.0
      %460 = vmatprep.mubr.f32.mxu0 0.0
      %461 = vmatmul.mubr.f32.gmra.mrb[0].mxu0 0.0
      %v462 = vpop.f32.mrb[0].mxu0
      %v463 = vadd.f32 0.0, %v462
      %v464 = vpop.f32.mrb[0].mxu0
      %465 = vdwg.mxu0
      %v466 = vadd.f32 %v322, %v392
      %v467 = vxor.u32 %v466, 2147483648
      %v468 = vmul.f32 %v467, 1.442695
      %v469 = vpow.pop %v468
      %v470 = vadd.f32 %v469, 1.0
      %v471 = vrcp.pop %v470
      %v472 = vmul.f32 1.0, %v471
      %v473 = vadd.f32 %v323, %v394
      %v474 = vxor.u32 %v473, 2147483648
      %v475 = vmul.f32 %v474, 1.442695
      %v476 = vpow.pop %v475
      %v477 = vadd.f32 %v476, 1.0
      %v478 = vrcp.pop %v477
      %v479 = vmul.f32 1.0, %v478
      %v481 = vlaneseq
      %v482 = vshrl.u32 %v481, 7
      %v483 = vsub.s32 0, %v482
      %v484 = vrot.slane %v317, %v483
      %v486 = vadd.f32 %v463, %v484
      %v487 = vmul.f32 %v472, %v486
      %v488 = vadd.f32 %v324, %v487
      %v489 = vtanh.pop %v488
      %v490 = vsub.f32 0.0, %v489
      %v491 = vmul.f32 %v479, %v490
      %v492 = vadd.f32 %v489, %v491
      %v493 = vstv %s318
      %vm494 = vcmp.lt.s32.totalorder %v493, %v267
      %v495 = vsel %vm494, 1, 0
      %v496 = vcvt.s32.f32 %v495
      %498 = vset.pattern.permute.xlu0 0
      %499 = vperm.xlu0 %498, %v496
      %v500 = vpop.permute.xlu0 %499
      %v502 = vmul.f32 %v500, %v492
      %s503 = smul.u32 %s318, 8
      %s504 = scalar_lea.vmem %s261, %s503
      %505 = vst [vmem:[%s504] sm:$0xff] %v502
      %v506 = vadd.f32 %v502, 0.0
      %s507 = smul.u32 %s17, 5
      %s508 = sadd.s32 %s507, 1
      %s509 = smul.u32 %s508, 3
      %s510 = smul.addr %s509, 8
      %s511 = scalar_lea.vmem %s248, %s510
      %v512 = vld [vmem:[%s511] sm:$0xff]
      %v513 = vld [vmem:[%s511 + $0x8] sm:$0xff]
      %v514 = vld [vmem:[%s511 + $0x10] sm:$0xff]
      %515 = vmatprep.subr.mxu0 %v269
      %516 = vmatpush1.msra.mxu0 %v268
      %517 = vmatprep.subr.mxu0 %v272
      %518 = vmatpush1.msra.mxu0 %v271
      %519 = vmatprep.subr.mxu0 %v275
      %520 = vmatpush1.msra.mxu0 %v274
      %521 = vmatprep.subr.mxu0 %v278
      %522 = vmatpush1.msra.mxu0 %v277
      %523 = vmatprep.subr.mxu0 %v281
      %524 = vmatpush1.msra.mxu0 %v280
      %525 = vmatprep.subr.mxu0 %v284
      %526 = vmatpush1.msra.mxu0 %v283
      %527 = vmatprep.subr.mxu0 %v287
      %528 = vmatpush1.msra.mxu0 %v286
      %529 = vmatprep.subr.mxu0 %v290
      %530 = vmatpush1.msra.mxu0 %v289
      %531 = vmatprep.subr.mxu0 %v293
      %532 = vmatpush1.msra.mxu0 %v292
      %533 = vmatprep.subr.mxu0 %v296
      %534 = vmatpush1.msra.mxu0 %v295
      %535 = vmatprep.subr.mxu0 %v299
      %536 = vmatpush1.msra.mxu0 %v298
      %537 = vmatprep.subr.mxu0 %v302
      %538 = vmatpush1.msra.mxu0 %v301
      %539 = vmatprep.subr.mxu0 %v305
      %540 = vmatpush1.msra.mxu0 %v304
      %541 = vmatprep.subr.mxu0 %v308
      %542 = vmatpush1.msra.mxu0 %v307
      %543 = vmatprep.subr.mxu0 %v311
      %544 = vmatpush1.msra.mxu0 %v310
      %545 = vmatprep.subr.mxu0 %v314
      %546 = vmatpush1.msra.mxu0 %v313
      %547 = vmatprep.subr.mxu0 0.0
      %548 = vmatpush1.msra.mxu0 0.0
      %549 = vmatprep.subr.mxu0 0.0
      %550 = vmatpush1.msra.mxu0 0.0
      %551 = vmatprep.subr.mxu0 0.0
      %552 = vmatpush1.msra.mxu0 0.0
      %553 = vmatprep.subr.mxu0 0.0
      %554 = vmatpush1.msra.mxu0 0.0
      %555 = vmatprep.subr.mxu0 0.0
      %556 = vmatpush1.msra.mxu0 0.0
      %557 = vmatprep.subr.mxu0 0.0
      %558 = vmatpush1.msra.mxu0 0.0
      %559 = vmatprep.subr.mxu0 0.0
      %560 = vmatpush1.msra.mxu0 0.0
      %561 = vmatprep.subr.mxu0 0.0
      %562 = vmatpush1.msra.mxu0 0.0
      %563 = vmatprep.subr.mxu0 0.0
      %564 = vmatpush1.msra.mxu0 0.0
      %565 = vmatprep.subr.mxu0 0.0
      %566 = vmatpush1.msra.mxu0 0.0
      %567 = vmatprep.subr.mxu0 0.0
      %568 = vmatpush1.msra.mxu0 0.0
      %569 = vmatprep.subr.mxu0 0.0
      %570 = vmatpush1.msra.mxu0 0.0
      %571 = vmatprep.subr.mxu0 0.0
      %572 = vmatpush1.msra.mxu0 0.0
      %573 = vmatprep.subr.mxu0 0.0
      %574 = vmatpush1.msra.mxu0 0.0
      %575 = vmatprep.subr.mxu0 0.0
      %576 = vmatpush1.msra.mxu0 0.0
      %577 = vmatprep.subr.mxu0 0.0
      %578 = vmatpush1.msra.mxu0 0.0
      %579 = vmatprep.mubr.f32.mxu0 0.0
      %580 = vmatmul.mubr.f32.gmra.mrb[0].mxu0 %v506
      %v581 = vpop.f32.mrb[0].mxu0
      %v582 = vadd.f32 0.0, %v581
      %v583 = vpop.f32.mrb[0].mxu0
      %v584 = vadd.f32 0.0, %v583
      %585 = vdwg.mxu0
      %586 = vmatprep.subr.mxu0 0.0
      %587 = vmatpush1.msra.mxu0 %v270
      %588 = vmatprep.subr.mxu0 0.0
      %589 = vmatpush1.msra.mxu0 %v273
      %590 = vmatprep.subr.mxu0 0.0
      %591 = vmatpush1.msra.mxu0 %v276
      %592 = vmatprep.subr.mxu0 0.0
      %593 = vmatpush1.msra.mxu0 %v279
      %594 = vmatprep.subr.mxu0 0.0
      %595 = vmatpush1.msra.mxu0 %v282
      %596 = vmatprep.subr.mxu0 0.0
      %597 = vmatpush1.msra.mxu0 %v285
      %598 = vmatprep.subr.mxu0 0.0
      %599 = vmatpush1.msra.mxu0 %v288
      %600 = vmatprep.subr.mxu0 0.0
      %601 = vmatpush1.msra.mxu0 %v291
      %602 = vmatprep.subr.mxu0 0.0
      %603 = vmatpush1.msra.mxu0 %v294
      %604 = vmatprep.subr.mxu0 0.0
      %605 = vmatpush1.msra.mxu0 %v297
      %606 = vmatprep.subr.mxu0 0.0
      %607 = vmatpush1.msra.mxu0 %v300
      %608 = vmatprep.subr.mxu0 0.0
      %609 = vmatpush1.msra.mxu0 %v303
      %610 = vmatprep.subr.mxu0 0.0
      %611 = vmatpush1.msra.mxu0 %v306
      %612 = vmatprep.subr.mxu0 0.0
      %613 = vmatpush1.msra.mxu0 %v309
      %614 = vmatprep.subr.mxu0 0.0
      %615 = vmatpush1.msra.mxu0 %v312
      %616 = vmatprep.subr.mxu0 0.0
      %617 = vmatpush1.msra.mxu0 %v315
      %618 = vmatprep.subr.mxu0 0.0
      %619 = vmatpush1.msra.mxu0 0.0
      %620 = vmatprep.subr.mxu0 0.0
      %621 = vmatpush1.msra.mxu0 0.0
      %622 = vmatprep.subr.mxu0 0.0
      %623 = vmatpush1.msra.mxu0 0.0
      %624 = vmatprep.subr.mxu0 0.0
      %625 = vmatpush1.msra.mxu0 0.0
      %626 = vmatprep.subr.mxu0 0.0
      %627 = vmatpush1.msra.mxu0 0.0
      %628 = vmatprep.subr.mxu0 0.0
      %629 = vmatpush1.msra.mxu0 0.0
      %630 = vmatprep.subr.mxu0 0.0
      %631 = vmatpush1.msra.mxu0 0.0
      %632 = vmatprep.subr.mxu0 0.0
      %633 = vmatpush1.msra.mxu0 0.0
      %634 = vmatprep.subr.mxu0 0.0
      %635 = vmatpush1.msra.mxu0 0.0
      %636 = vmatprep.subr.mxu0 0.0
      %637 = vmatpush1.msra.mxu0 0.0
      %638 = vmatprep.subr.mxu0 0.0
      %639 = vmatpush1.msra.mxu0 0.0
      %640 = vmatprep.subr.mxu0 0.0
      %641 = vmatpush1.msra.mxu0 0.0
      %642 = vmatprep.subr.mxu0 0.0
      %643 = vmatpush1.msra.mxu0 0.0
      %644 = vmatprep.subr.mxu0 0.0
      %645 = vmatpush1.msra.mxu0 0.0
      %646 = vmatprep.subr.mxu0 0.0
      %647 = vmatpush1.msra.mxu0 0.0
      %648 = vmatprep.subr.mxu0 0.0
      %649 = vmatpush1.msra.mxu0 0.0
      %650 = vmatprep.mubr.f32.mxu0 0.0
      %651 = vmatmul.mubr.f32.gmra.mrb[0].mxu0 %v506
      %v652 = vpop.f32.mrb[0].mxu0
      %v653 = vadd.f32 0.0, %v652
      %v654 = vpop.f32.mrb[0].mxu0
      %655 = vdwg.mxu0
      %v656 = vadd.f32 %v512, %v582
      %v657 = vxor.u32 %v656, 2147483648
      %v658 = vmul.f32 %v657, 1.442695
      %v659 = vpow.pop %v658
      %v660 = vadd.f32 %v659, 1.0
      %v661 = vrcp.pop %v660
      %v662 = vmul.f32 1.0, %v661
      %v663 = vadd.f32 %v513, %v584
      %v664 = vxor.u32 %v663, 2147483648
      %v665 = vmul.f32 %v664, 1.442695
      %v666 = vpow.pop %v665
      %v667 = vadd.f32 %v666, 1.0
      %v668 = vrcp.pop %v667
      %v669 = vmul.f32 1.0, %v668
      %v670 = vadd.f32 %v653, %v484
      %v671 = vmul.f32 %v662, %v670
      %v672 = vadd.f32 %v514, %v671
      %v673 = vtanh.pop %v672
      %v674 = vsub.f32 %v506, %v673
      %v675 = vmul.f32 %v669, %v674
      %v676 = vadd.f32 %v673, %v675
      %v677 = vstv %s508
      %vm678 = vcmp.lt.s32.totalorder %v677, %v267
      %v679 = vsel %vm678, 1, 0
      %v680 = vcvt.s32.f32 %v679
      %682 = vset.pattern.permute.xlu0 0
      %683 = vperm.xlu0 %682, %v680
      %v684 = vpop.permute.xlu0 %683
      %v686 = vmul.f32 %v684, %v676
      %s687 = smul.u32 %s508, 8
      %s688 = scalar_lea.vmem %s261, %s687
      %689 = vst [vmem:[%s688] sm:$0xff] %v686
      %v690 = vsub.f32 %v676, %v506
      %v691 = vmul.f32 %v684, %v690
      %v692 = vadd.f32 %v506, %v691
      %s693 = smul.u32 %s17, 3
      %s694 = sadd.s32 %s693, 2
      %s695 = smul.u32 %s694, 3
      %s696 = smul.addr %s695, 8
      %s697 = scalar_lea.vmem %s248, %s696
      %v698 = vld [vmem:[%s697] sm:$0xff]
      %v699 = vld [vmem:[%s697 + $0x8] sm:$0xff]
      %v700 = vld [vmem:[%s697 + $0x10] sm:$0xff]
      %701 = vmatprep.subr.mxu0 %v269
      %702 = vmatpush1.msra.mxu0 %v268
      %703 = vmatprep.subr.mxu0 %v272
      %704 = vmatpush1.msra.mxu0 %v271
      %705 = vmatprep.subr.mxu0 %v275
      %706 = vmatpush1.msra.mxu0 %v274
      %707 = vmatprep.subr.mxu0 %v278
      %708 = vmatpush1.msra.mxu0 %v277
      %709 = vmatprep.subr.mxu0 %v281
      %710 = vmatpush1.msra.mxu0 %v280
      %711 = vmatprep.subr.mxu0 %v284
      %712 = vmatpush1.msra.mxu0 %v283
      %713 = vmatprep.subr.mxu0 %v287
      %714 = vmatpush1.msra.mxu0 %v286
      %715 = vmatprep.subr.mxu0 %v290
      %716 = vmatpush1.msra.mxu0 %v289
      %717 = vmatprep.subr.mxu0 %v293
      %718 = vmatpush1.msra.mxu0 %v292
      %719 = vmatprep.subr.mxu0 %v296
      %720 = vmatpush1.msra.mxu0 %v295
      %721 = vmatprep.subr.mxu0 %v299
      %722 = vmatpush1.msra.mxu0 %v298
      %723 = vmatprep.subr.mxu0 %v302
      %724 = vmatpush1.msra.mxu0 %v301
      %725 = vmatprep.subr.mxu0 %v305
      %726 = vmatpush1.msra.mxu0 %v304
      %727 = vmatprep.subr.mxu0 %v308
      %728 = vmatpush1.msra.mxu0 %v307
      %729 = vmatprep.subr.mxu0 %v311
      %730 = vmatpush1.msra.mxu0 %v310
      %731 = vmatprep.subr.mxu0 %v314
      %732 = vmatpush1.msra.mxu0 %v313
      %733 = vmatprep.subr.mxu0 0.0
      %734 = vmatpush1.msra.mxu0 0.0
      %735 = vmatprep.subr.mxu0 0.0
      %736 = vmatpush1.msra.mxu0 0.0
      %737 = vmatprep.subr.mxu0 0.0
      %738 = vmatpush1.msra.mxu0 0.0
      %739 = vmatprep.subr.mxu0 0.0
      %740 = vmatpush1.msra.mxu0 0.0
      %741 = vmatprep.subr.mxu0 0.0
      %742 = vmatpush1.msra.mxu0 0.0
      %743 = vmatprep.subr.mxu0 0.0
      %744 = vmatpush1.msra.mxu0 0.0
      %745 = vmatprep.subr.mxu0 0.0
      %746 = vmatpush1.msra.mxu0 0.0
      %747 = vmatprep.subr.mxu0 0.0
      %748 = vmatpush1.msra.mxu0 0.0
      %749 = vmatprep.subr.mxu0 0.0
      %750 = vmatpush1.msra.mxu0 0.0
      %751 = vmatprep.subr.mxu0 0.0
      %752 = vmatpush1.msra.mxu0 0.0
      %753 = vmatprep.subr.mxu0 0.0
      %754 = vmatpush1.msra.mxu0 0.0
      %755 = vmatprep.subr.mxu0 0.0
      %756 = vmatpush1.msra.mxu0 0.0
      %757 = vmatprep.subr.mxu0 0.0
      %758 = vmatpush1.msra.mxu0 0.0
      %759 = vmatprep.subr.mxu0 0.0
      %760 = vmatpush1.msra.mxu0 0.0
      %761 = vmatprep.subr.mxu0 0.0
      %762 = vmatpush1.msra.mxu0 0.0
      %763 = vmatprep.subr.mxu0 0.0
      %764 = vmatpush1.msra.mxu0 0.0
      %765 = vmatprep.mubr.f32.mxu0 0.0
      %766 = vmatmul.mubr.f32.gmra.mrb[0].mxu0 %v692
      %v767 = vpop.f32.mrb[0].mxu0
      %v768 = vadd.f32 0.0, %v767
      %v769 = vpop.f32.mrb[0].mxu0
      %v770 = vadd.f32 0.0, %v769
      %771 = vdwg.mxu0
      %772 = vmatprep.subr.mxu0 0.0
      %773 = vmatpush1.msra.mxu0 %v270
      %774 = vmatprep.subr.mxu0 0.0
      %775 = vmatpush1.msra.mxu0 %v273
      %776 = vmatprep.subr.mxu0 0.0
      %777 = vmatpush1.msra.mxu0 %v276
      %778 = vmatprep.subr.mxu0 0.0
      %779 = vmatpush1.msra.mxu0 %v279
      %780 = vmatprep.subr.mxu0 0.0
      %781 = vmatpush1.msra.mxu0 %v282
      %782 = vmatprep.subr.mxu0 0.0
      %783 = vmatpush1.msra.mxu0 %v285
      %784 = vmatprep.subr.mxu0 0.0
      %785 = vmatpush1.msra.mxu0 %v288
      %786 = vmatprep.subr.mxu0 0.0
      %787 = vmatpush1.msra.mxu0 %v291
      %788 = vmatprep.subr.mxu0 0.0
      %789 = vmatpush1.msra.mxu0 %v294
      %790 = vmatprep.subr.mxu0 0.0
      %791 = vmatpush1.msra.mxu0 %v297
      %792 = vmatprep.subr.mxu0 0.0
      %793 = vmatpush1.msra.mxu0 %v300
      %794 = vmatprep.subr.mxu0 0.0
      %795 = vmatpush1.msra.mxu0 %v303
      %796 = vmatprep.subr.mxu0 0.0
      %797 = vmatpush1.msra.mxu0 %v306
      %798 = vmatprep.subr.mxu0 0.0
      %799 = vmatpush1.msra.mxu0 %v309
      %800 = vmatprep.subr.mxu0 0.0
      %801 = vmatpush1.msra.mxu0 %v312
      %802 = vmatprep.subr.mxu0 0.0
      %803 = vmatpush1.msra.mxu0 %v315
      %804 = vmatprep.subr.mxu0 0.0
      %805 = vmatpush1.msra.mxu0 0.0
      %806 = vmatprep.subr.mxu0 0.0
      %807 = vmatpush1.msra.mxu0 0.0
      %808 = vmatprep.subr.mxu0 0.0
      %809 = vmatpush1.msra.mxu0 0.0
      %810 = vmatprep.subr.mxu0 0.0
      %811 = vmatpush1.msra.mxu0 0.0
      %812 = vmatprep.subr.mxu0 0.0
      %813 = vmatpush1.msra.mxu0 0.0
      %814 = vmatprep.subr.mxu0 0.0
      %815 = vmatpush1.msra.mxu0 0.0
      %816 = vmatprep.subr.mxu0 0.0
      %817 = vmatpush1.msra.mxu0 0.0
      %818 = vmatprep.subr.mxu0 0.0
      %819 = vmatpush1.msra.mxu0 0.0
      %820 = vmatprep.subr.mxu0 0.0
      %821 = vmatpush1.msra.mxu0 0.0
      %822 = vmatprep.subr.mxu0 0.0
      %823 = vmatpush1.msra.mxu0 0.0
      %824 = vmatprep.subr.mxu0 0.0
      %825 = vmatpush1.msra.mxu0 0.0
      %826 = vmatprep.subr.mxu0 0.0
      %827 = vmatpush1.msra.mxu0 0.0
      %828 = vmatprep.subr.mxu0 0.0
      %829 = vmatpush1.msra.mxu0 0.0
      %830 = vmatprep.subr.mxu0 0.0
      %831 = vmatpush1.msra.mxu0 0.0
      %832 = vmatprep.subr.mxu0 0.0
      %833 = vmatpush1.msra.mxu0 0.0
      %834 = vmatprep.subr.mxu0 0.0
      %835 = vmatpush1.msra.mxu0 0.0
      %836 = vmatprep.mubr.f32.mxu0 0.0
      %837 = vmatmul.mubr.f32.gmra.mrb[0].mxu0 %v692
      %v838 = vpop.f32.mrb[0].mxu0
      %v839 = vadd.f32 0.0, %v838
      %v840 = vpop.f32.mrb[0].mxu0
      %841 = vdwg.mxu0
      %v842 = vadd.f32 %v698, %v768
      %v843 = vxor.u32 %v842, 2147483648
      %v844 = vmul.f32 %v843, 1.442695
      %v845 = vpow.pop %v844
      %v846 = vadd.f32 %v845, 1.0
      %v847 = vrcp.pop %v846
      %v848 = vmul.f32 1.0, %v847
      %v849 = vadd.f32 %v699, %v770
      %v850 = vxor.u32 %v849, 2147483648
      %v851 = vmul.f32 %v850, 1.442695
      %v852 = vpow.pop %v851
      %v853 = vadd.f32 %v852, 1.0
      %v854 = vrcp.pop %v853
      %v855 = vmul.f32 1.0, %v854
      %v856 = vadd.f32 %v839, %v484
      %v857 = vmul.f32 %v848, %v856
      %v858 = vadd.f32 %v700, %v857
      %v859 = vtanh.pop %v858
      %v860 = vsub.f32 %v692, %v859
      %v861 = vmul.f32 %v855, %v860
      %v862 = vadd.f32 %v859, %v861
      %v863 = vstv %s694
      %vm864 = vcmp.lt.s32.totalorder %v863, %v267
      %v865 = vsel %vm864, 1, 0
      %v866 = vcvt.s32.f32 %v865
      %868 = vset.pattern.permute.xlu0 0
      %869 = vperm.xlu0 %868, %v866
      %v870 = vpop.permute.xlu0 %869
      %v872 = vmul.f32 %v870, %v862
      %s873 = smul.u32 %s694, 8
      %s874 = scalar_lea.vmem %s261, %s873
      %875 = vst [vmem:[%s874] sm:$0xff] %v872
      %v876 = vsub.f32 %v862, %v692
      %v877 = vmul.f32 %v870, %v876
      %v878 = vadd.f32 %v692, %v877
      %s879 = sadd.s32 %s17, 3
      %s880 = smul.u32 %s879, 3
      %s881 = smul.addr %s880, 8
      %s882 = scalar_lea.vmem %s248, %s881
      %v883 = vld [vmem:[%s882] sm:$0xff]
      %v884 = vld [vmem:[%s882 + $0x8] sm:$0xff]
      %v885 = vld [vmem:[%s882 + $0x10] sm:$0xff]
      %886 = vmatprep.subr.mxu0 %v269
      %887 = vmatpush1.msra.mxu0 %v268
      %888 = vmatprep.subr.mxu0 %v272
      %889 = vmatpush1.msra.mxu0 %v271
      %890 = vmatprep.subr.mxu0 %v275
      %891 = vmatpush1.msra.mxu0 %v274
      %892 = vmatprep.subr.mxu0 %v278
      %893 = vmatpush1.msra.mxu0 %v277
      %894 = vmatprep.subr.mxu0 %v281
      %895 = vmatpush1.msra.mxu0 %v280
      %896 = vmatprep.subr.mxu0 %v284
      %897 = vmatpush1.msra.mxu0 %v283
      %898 = vmatprep.subr.mxu0 %v287
      %899 = vmatpush1.msra.mxu0 %v286
      %900 = vmatprep.subr.mxu0 %v290
      %901 = vmatpush1.msra.mxu0 %v289
      %902 = vmatprep.subr.mxu0 %v293
      %903 = vmatpush1.msra.mxu0 %v292
      %904 = vmatprep.subr.mxu0 %v296
      %905 = vmatpush1.msra.mxu0 %v295
      %906 = vmatprep.subr.mxu0 %v299
      %907 = vmatpush1.msra.mxu0 %v298
      %908 = vmatprep.subr.mxu0 %v302
      %909 = vmatpush1.msra.mxu0 %v301
      %910 = vmatprep.subr.mxu0 %v305
      %911 = vmatpush1.msra.mxu0 %v304
      %912 = vmatprep.subr.mxu0 %v308
      %913 = vmatpush1.msra.mxu0 %v307
      %914 = vmatprep.subr.mxu0 %v311
      %915 = vmatpush1.msra.mxu0 %v310
      %916 = vmatprep.subr.mxu0 %v314
      %917 = vmatpush1.msra.mxu0 %v313
      %918 = vmatprep.subr.mxu0 0.0
      %919 = vmatpush1.msra.mxu0 0.0
      %920 = vmatprep.subr.mxu0 0.0
      %921 = vmatpush1.msra.mxu0 0.0
      %922 = vmatprep.subr.mxu0 0.0
      %923 = vmatpush1.msra.mxu0 0.0
      %924 = vmatprep.subr.mxu0 0.0
      %925 = vmatpush1.msra.mxu0 0.0
      %926 = vmatprep.subr.mxu0 0.0
      %927 = vmatpush1.msra.mxu0 0.0
      %928 = vmatprep.subr.mxu0 0.0
      %929 = vmatpush1.msra.mxu0 0.0
      %930 = vmatprep.subr.mxu0 0.0
      %931 = vmatpush1.msra.mxu0 0.0
      %932 = vmatprep.subr.mxu0 0.0
      %933 = vmatpush1.msra.mxu0 0.0
      %934 = vmatprep.subr.mxu0 0.0
      %935 = vmatpush1.msra.mxu0 0.0
      %936 = vmatprep.subr.mxu0 0.0
      %937 = vmatpush1.msra.mxu0 0.0
      %938 = vmatprep.subr.mxu0 0.0
      %939 = vmatpush1.msra.mxu0 0.0
      %940 = vmatprep.subr.mxu0 0.0
      %941 = vmatpush1.msra.mxu0 0.0
      %942 = vmatprep.subr.mxu0 0.0
      %943 = vmatpush1.msra.mxu0 0.0
      %944 = vmatprep.subr.mxu0 0.0
      %945 = vmatpush1.msra.mxu0 0.0
      %946 = vmatprep.subr.mxu0 0.0
      %947 = vmatpush1.msra.mxu0 0.0
      %948 = vmatprep.subr.mxu0 0.0
      %949 = vmatpush1.msra.mxu0 0.0
      %950 = vmatprep.mubr.f32.mxu0 0.0
      %951 = vmatmul.mubr.f32.gmra.mrb[0].mxu0 %v878
      %v952 = vpop.f32.mrb[0].mxu0
      %v953 = vadd.f32 0.0, %v952
      %v954 = vpop.f32.mrb[0].mxu0
      %v955 = vadd.f32 0.0, %v954
      %956 = vdwg.mxu0
      %957 = vmatprep.subr.mxu0 0.0
      %958 = vmatpush1.msra.mxu0 %v270
      %959 = vmatprep.subr.mxu0 0.0
      %960 = vmatpush1.msra.mxu0 %v273
      %961 = vmatprep.subr.mxu0 0.0
      %962 = vmatpush1.msra.mxu0 %v276
      %963 = vmatprep.subr.mxu0 0.0
      %964 = vmatpush1.msra.mxu0 %v279
      %965 = vmatprep.subr.mxu0 0.0
      %966 = vmatpush1.msra.mxu0 %v282
      %967 = vmatprep.subr.mxu0 0.0
      %968 = vmatpush1.msra.mxu0 %v285
      %969 = vmatprep.subr.mxu0 0.0
      %970 = vmatpush1.msra.mxu0 %v288
      %971 = vmatprep.subr.mxu0 0.0
      %972 = vmatpush1.msra.mxu0 %v291
      %973 = vmatprep.subr.mxu0 0.0
      %974 = vmatpush1.msra.mxu0 %v294
      %975 = vmatprep.subr.mxu0 0.0
      %976 = vmatpush1.msra.mxu0 %v297
      %977 = vmatprep.subr.mxu0 0.0
      %978 = vmatpush1.msra.mxu0 %v300
      %979 = vmatprep.subr.mxu0 0.0
      %980 = vmatpush1.msra.mxu0 %v303
      %981 = vmatprep.subr.mxu0 0.0
      %982 = vmatpush1.msra.mxu0 %v306
      %983 = vmatprep.subr.mxu0 0.0
      %984 = vmatpush1.msra.mxu0 %v309
      %985 = vmatprep.subr.mxu0 0.0
      %986 = vmatpush1.msra.mxu0 %v312
      %987 = vmatprep.subr.mxu0 0.0
      %988 = vmatpush1.msra.mxu0 %v315
      %989 = vmatprep.subr.mxu0 0.0
      %990 = vmatpush1.msra.mxu0 0.0
      %991 = vmatprep.subr.mxu0 0.0
      %992 = vmatpush1.msra.mxu0 0.0
      %993 = vmatprep.subr.mxu0 0.0
      %994 = vmatpush1.msra.mxu0 0.0
      %995 = vmatprep.subr.mxu0 0.0
      %996 = vmatpush1.msra.mxu0 0.0
      %997 = vmatprep.subr.mxu0 0.0
      %998 = vmatpush1.msra.mxu0 0.0
      %999 = vmatprep.subr.mxu0 0.0
      %1000 = vmatpush1.msra.mxu0 0.0
      %1001 = vmatprep.subr.mxu0 0.0
      %1002 = vmatpush1.msra.mxu0 0.0
      %1003 = vmatprep.subr.mxu0 0.0
      %1004 = vmatpush1.msra.mxu0 0.0
      %1005 = vmatprep.subr.mxu0 0.0
      %1006 = vmatpush1.msra.mxu0 0.0
      %1007 = vmatprep.subr.mxu0 0.0
      %1008 = vmatpush1.msra.mxu0 0.0
      %1009 = vmatprep.subr.mxu0 0.0
      %1010 = vmatpush1.msra.mxu0 0.0
      %1011 = vmatprep.subr.mxu0 0.0
      %1012 = vmatpush1.msra.mxu0 0.0
      %1013 = vmatprep.subr.mxu0 0.0
      %1014 = vmatpush1.msra.mxu0 0.0
      %1015 = vmatprep.subr.mxu0 0.0
      %1016 = vmatpush1.msra.mxu0 0.0
      %1017 = vmatprep.subr.mxu0 0.0
      %1018 = vmatpush1.msra.mxu0 0.0
      %1019 = vmatprep.subr.mxu0 0.0
      %1020 = vmatpush1.msra.mxu0 0.0
      %1021 = vmatprep.mubr.f32.mxu0 0.0
      %1022 = vmatmul.mubr.f32.gmra.mrb[0].mxu0 %v878
      %v1023 = vpop.f32.mrb[0].mxu0
      %v1024 = vadd.f32 0.0, %v1023
      %v1025 = vpop.f32.mrb[0].mxu0
      %1026 = vdwg.mxu0
      %v1027 = vadd.f32 %v883, %v953
      %v1028 = vxor.u32 %v1027, 2147483648
      %v1029 = vmul.f32 %v1028, 1.442695
      %v1030 = vpow.pop %v1029
      %v1031 = vadd.f32 %v1030, 1.0
      %v1032 = vrcp.pop %v1031
      %v1033 = vmul.f32 1.0, %v1032
      %v1034 = vadd.f32 %v884, %v955
      %v1035 = vxor.u32 %v1034, 2147483648
      %v1036 = vmul.f32 %v1035, 1.442695
      %v1037 = vpow.pop %v1036
      %v1038 = vadd.f32 %v1037, 1.0
      %v1039 = vrcp.pop %v1038
      %v1040 = vmul.f32 1.0, %v1039
      %v1041 = vadd.f32 %v1024, %v484
      %v1042 = vmul.f32 %v1033, %v1041
      %v1043 = vadd.f32 %v885, %v1042
      %v1044 = vtanh.pop %v1043
      %v1045 = vsub.f32 %v878, %v1044
      %v1046 = vmul.f32 %v1040, %v1045
      %v1047 = vadd.f32 %v1044, %v1046
      %v1048 = vstv %s879
      %vm1049 = vcmp.lt.s32.totalorder %v1048, %v267
      %v1050 = vsel %vm1049, 1, 0
      %v1051 = vcvt.s32.f32 %v1050
      %1053 = vset.pattern.permute.xlu0 0
      %1054 = vperm.xlu0 %1053, %v1051
      %v1055 = vpop.permute.xlu0 %1054
      %v1057 = vmul.f32 %v1055, %v1047
      %s1058 = smul.u32 %s879, 8
      %s1059 = scalar_lea.vmem %s261, %s1058
      %1060 = vst [vmem:[%s1059] sm:$0xff] %v1057
      %v1061 = vsub.f32 %v1047, %v878
      %v1062 = vmul.f32 %v1055, %v1061
      %v1063 = vadd.f32 %v878, %v1062
      %s1064 = ssub.s32 4, %s17
      %s1065 = smul.u32 %s1064, 3
      %s1066 = smul.addr %s1065, 8
      %s1067 = scalar_lea.vmem %s248, %s1066
      %v1068 = vld [vmem:[%s1067] sm:$0xff]
      %v1069 = vld [vmem:[%s1067 + $0x8] sm:$0xff]
      %v1070 = vld [vmem:[%s1067 + $0x10] sm:$0xff]
      %1071 = vmatprep.subr.mxu0 %v269
      %1072 = vmatpush1.msra.mxu0 %v268
      %1073 = vmatprep.subr.mxu0 %v272
      %1074 = vmatpush1.msra.mxu0 %v271
      %1075 = vmatprep.subr.mxu0 %v275
      %1076 = vmatpush1.msra.mxu0 %v274
      %1077 = vmatprep.subr.mxu0 %v278
      %1078 = vmatpush1.msra.mxu0 %v277
      %1079 = vmatprep.subr.mxu0 %v281
      %1080 = vmatpush1.msra.mxu0 %v280
      %1081 = vmatprep.subr.mxu0 %v284
      %1082 = vmatpush1.msra.mxu0 %v283
      %1083 = vmatprep.subr.mxu0 %v287
      %1084 = vmatpush1.msra.mxu0 %v286
      %1085 = vmatprep.subr.mxu0 %v290
      %1086 = vmatpush1.msra.mxu0 %v289
      %1087 = vmatprep.subr.mxu0 %v293
      %1088 = vmatpush1.msra.mxu0 %v292
      %1089 = vmatprep.subr.mxu0 %v296
      %1090 = vmatpush1.msra.mxu0 %v295
      %1091 = vmatprep.subr.mxu0 %v299
      %1092 = vmatpush1.msra.mxu0 %v298
      %1093 = vmatprep.subr.mxu0 %v302
      %1094 = vmatpush1.msra.mxu0 %v301
      %1095 = vmatprep.subr.mxu0 %v305
      %1096 = vmatpush1.msra.mxu0 %v304
      %1097 = vmatprep.subr.mxu0 %v308
      %1098 = vmatpush1.msra.mxu0 %v307
      %1099 = vmatprep.subr.mxu0 %v311
      %1100 = vmatpush1.msra.mxu0 %v310
      %1101 = vmatprep.subr.mxu0 %v314
      %1102 = vmatpush1.msra.mxu0 %v313
      %1103 = vmatprep.subr.mxu0 0.0
      %1104 = vmatpush1.msra.mxu0 0.0
      %1105 = vmatprep.subr.mxu0 0.0
      %1106 = vmatpush1.msra.mxu0 0.0
      %1107 = vmatprep.subr.mxu0 0.0
      %1108 = vmatpush1.msra.mxu0 0.0
      %1109 = vmatprep.subr.mxu0 0.0
      %1110 = vmatpush1.msra.mxu0 0.0
      %1111 = vmatprep.subr.mxu0 0.0
      %1112 = vmatpush1.msra.mxu0 0.0
      %1113 = vmatprep.subr.mxu0 0.0
      %1114 = vmatpush1.msra.mxu0 0.0
      %1115 = vmatprep.subr.mxu0 0.0
      %1116 = vmatpush1.msra.mxu0 0.0
      %1117 = vmatprep.subr.mxu0 0.0
      %1118 = vmatpush1.msra.mxu0 0.0
      %1119 = vmatprep.subr.mxu0 0.0
      %1120 = vmatpush1.msra.mxu0 0.0
      %1121 = vmatprep.subr.mxu0 0.0
      %1122 = vmatpush1.msra.mxu0 0.0
      %1123 = vmatprep.subr.mxu0 0.0
      %1124 = vmatpush1.msra.mxu0 0.0
      %1125 = vmatprep.subr.mxu0 0.0
      %1126 = vmatpush1.msra.mxu0 0.0
      %1127 = vmatprep.subr.mxu0 0.0
      %1128 = vmatpush1.msra.mxu0 0.0
      %1129 = vmatprep.subr.mxu0 0.0
      %1130 = vmatpush1.msra.mxu0 0.0
      %1131 = vmatprep.subr.mxu0 0.0
      %1132 = vmatpush1.msra.mxu0 0.0
      %1133 = vmatprep.subr.mxu0 0.0
      %1134 = vmatpush1.msra.mxu0 0.0
      %1135 = vmatprep.mubr.f32.mxu0 0.0
      %1136 = vmatmul.mubr.f32.gmra.mrb[0].mxu0 %v1063
      %v1137 = vpop.f32.mrb[0].mxu0
      %v1138 = vadd.f32 0.0, %v1137
      %v1139 = vpop.f32.mrb[0].mxu0
      %v1140 = vadd.f32 0.0, %v1139
      %1141 = vdwg.mxu0
      %1142 = vmatprep.subr.mxu0 0.0
      %1143 = vmatpush1.msra.mxu0 %v270
      %1144 = vmatprep.subr.mxu0 0.0
      %1145 = vmatpush1.msra.mxu0 %v273
      %1146 = vmatprep.subr.mxu0 0.0
      %1147 = vmatpush1.msra.mxu0 %v276
      %1148 = vmatprep.subr.mxu0 0.0
      %1149 = vmatpush1.msra.mxu0 %v279
      %1150 = vmatprep.subr.mxu0 0.0
      %1151 = vmatpush1.msra.mxu0 %v282
      %1152 = vmatprep.subr.mxu0 0.0
      %1153 = vmatpush1.msra.mxu0 %v285
      %1154 = vmatprep.subr.mxu0 0.0
      %1155 = vmatpush1.msra.mxu0 %v288
      %1156 = vmatprep.subr.mxu0 0.0
      %1157 = vmatpush1.msra.mxu0 %v291
      %1158 = vmatprep.subr.mxu0 0.0
      %1159 = vmatpush1.msra.mxu0 %v294
      %1160 = vmatprep.subr.mxu0 0.0
      %1161 = vmatpush1.msra.mxu0 %v297
      %1162 = vmatprep.subr.mxu0 0.0
      %1163 = vmatpush1.msra.mxu0 %v300
      %1164 = vmatprep.subr.mxu0 0.0
      %1165 = vmatpush1.msra.mxu0 %v303
      %1166 = vmatprep.subr.mxu0 0.0
      %1167 = vmatpush1.msra.mxu0 %v306
      %1168 = vmatprep.subr.mxu0 0.0
      %1169 = vmatpush1.msra.mxu0 %v309
      %1170 = vmatprep.subr.mxu0 0.0
      %1171 = vmatpush1.msra.mxu0 %v312
      %1172 = vmatprep.subr.mxu0 0.0
      %1173 = vmatpush1.msra.mxu0 %v315
      %1174 = vmatprep.subr.mxu0 0.0
      %1175 = vmatpush1.msra.mxu0 0.0
      %1176 = vmatprep.subr.mxu0 0.0
      %1177 = vmatpush1.msra.mxu0 0.0
      %1178 = vmatprep.subr.mxu0 0.0
      %1179 = vmatpush1.msra.mxu0 0.0
      %1180 = vmatprep.subr.mxu0 0.0
      %1181 = vmatpush1.msra.mxu0 0.0
      %1182 = vmatprep.subr.mxu0 0.0
      %1183 = vmatpush1.msra.mxu0 0.0
      %1184 = vmatprep.subr.mxu0 0.0
      %1185 = vmatpush1.msra.mxu0 0.0
      %1186 = vmatprep.subr.mxu0 0.0
      %1187 = vmatpush1.msra.mxu0 0.0
      %1188 = vmatprep.subr.mxu0 0.0
      %1189 = vmatpush1.msra.mxu0 0.0
      %1190 = vmatprep.subr.mxu0 0.0
      %1191 = vmatpush1.msra.mxu0 0.0
      %1192 = vmatprep.subr.mxu0 0.0
      %1193 = vmatpush1.msra.mxu0 0.0
      %1194 = vmatprep.subr.mxu0 0.0
      %1195 = vmatpush1.msra.mxu0 0.0
      %1196 = vmatprep.subr.mxu0 0.0
      %1197 = vmatpush1.msra.mxu0 0.0
      %1198 = vmatprep.subr.mxu0 0.0
      %1199 = vmatpush1.msra.mxu0 0.0
      %1200 = vmatprep.subr.mxu0 0.0
      %1201 = vmatpush1.msra.mxu0 0.0
      %1202 = vmatprep.subr.mxu0 0.0
      %1203 = vmatpush1.msra.mxu0 0.0
      %1204 = vmatprep.subr.mxu0 0.0
      %1205 = vmatpush1.msra.mxu0 0.0
      %1206 = vmatprep.mubr.f32.mxu0 0.0
      %1207 = vmatmul.mubr.f32.gmra.mrb[0].mxu0 %v1063
      %v1208 = vpop.f32.mrb[0].mxu0
      %v1209 = vadd.f32 0.0, %v1208
      %v1210 = vpop.f32.mrb[0].mxu0
      %1211 = vdwg.mxu0
      %v1212 = vadd.f32 %v1068, %v1138
      %v1213 = vxor.u32 %v1212, 2147483648
      %v1214 = vmul.f32 %v1213, 1.442695
      %v1215 = vpow.pop %v1214
      %v1216 = vadd.f32 %v1215, 1.0
      %v1217 = vrcp.pop %v1216
      %v1218 = vmul.f32 1.0, %v1217
      %v1219 = vadd.f32 %v1069, %v1140
      %v1220 = vxor.u32 %v1219, 2147483648
      %v1221 = vmul.f32 %v1220, 1.442695
      %v1222 = vpow.pop %v1221
      %v1223 = vadd.f32 %v1222, 1.0
      %v1224 = vrcp.pop %v1223
      %v1225 = vmul.f32 1.0, %v1224
      %v1226 = vadd.f32 %v1209, %v484
      %v1227 = vmul.f32 %v1218, %v1226
      %v1228 = vadd.f32 %v1070, %v1227
      %v1229 = vtanh.pop %v1228
      %v1230 = vsub.f32 %v1063, %v1229
      %v1231 = vmul.f32 %v1225, %v1230
      %v1232 = vadd.f32 %v1229, %v1231
      %v1233 = vstv %s1064
      %vm1234 = vcmp.lt.s32.totalorder %v1233, %v267
      %v1235 = vsel %vm1234, 1, 0
      %v1236 = vcvt.s32.f32 %v1235
      %1238 = vset.pattern.permute.xlu0 0
      %1239 = vperm.xlu0 %1238, %v1236
      %v1240 = vpop.permute.xlu0 %1239
      %v1242 = vmul.f32 %v1240, %v1232
      %s1243 = smul.u32 %s1064, 8
      %s1244 = scalar_lea.vmem %s261, %s1243
      %1245 = vst [vmem:[%s1244] sm:$0xff] %v1242
      %v1246 = vsub.f32 %v1232, %v1063
      %v1247 = vmul.f32 %v1240, %v1246
      %v1248 = vadd.f32 %v1063, %v1247
      %s1249 = smul.u32 %s17, 4294967293
      %s1250 = sadd.s32 %s1249, 5
      %s1251 = smul.u32 %s1250, 3
      %s1252 = smul.addr %s1251, 8
      %s1253 = scalar_lea.vmem %s248, %s1252
      %v1254 = vld [vmem:[%s1253] sm:$0xff]
      %v1255 = vld [vmem:[%s1253 + $0x8] sm:$0xff]
      %v1256 = vld [vmem:[%s1253 + $0x10] sm:$0xff]
      %1257 = vmatprep.subr.mxu0 %v269
      %1258 = vmatpush1.msra.mxu0 %v268
      %1259 = vmatprep.subr.mxu0 %v272
      %1260 = vmatpush1.msra.mxu0 %v271
      %1261 = vmatprep.subr.mxu0 %v275
      %1262 = vmatpush1.msra.mxu0 %v274
      %1263 = vmatprep.subr.mxu0 %v278
      %1264 = vmatpush1.msra.mxu0 %v277
      %1265 = vmatprep.subr.mxu0 %v281
      %1266 = vmatpush1.msra.mxu0 %v280
      %1267 = vmatprep.subr.mxu0 %v284
      %1268 = vmatpush1.msra.mxu0 %v283
      %1269 = vmatprep.subr.mxu0 %v287
      %1270 = vmatpush1.msra.mxu0 %v286
      %1271 = vmatprep.subr.mxu0 %v290
      %1272 = vmatpush1.msra.mxu0 %v289
      %1273 = vmatprep.subr.mxu0 %v293
      %1274 = vmatpush1.msra.mxu0 %v292
      %1275 = vmatprep.subr.mxu0 %v296
      %1276 = vmatpush1.msra.mxu0 %v295
      %1277 = vmatprep.subr.mxu0 %v299
      %1278 = vmatpush1.msra.mxu0 %v298
      %1279 = vmatprep.subr.mxu0 %v302
      %1280 = vmatpush1.msra.mxu0 %v301
      %1281 = vmatprep.subr.mxu0 %v305
      %1282 = vmatpush1.msra.mxu0 %v304
      %1283 = vmatprep.subr.mxu0 %v308
      %1284 = vmatpush1.msra.mxu0 %v307
      %1285 = vmatprep.subr.mxu0 %v311
      %1286 = vmatpush1.msra.mxu0 %v310
      %1287 = vmatprep.subr.mxu0 %v314
      %1288 = vmatpush1.msra.mxu0 %v313
      %1289 = vmatprep.subr.mxu0 0.0
      %1290 = vmatpush1.msra.mxu0 0.0
      %1291 = vmatprep.subr.mxu0 0.0
      %1292 = vmatpush1.msra.mxu0 0.0
      %1293 = vmatprep.subr.mxu0 0.0
      %1294 = vmatpush1.msra.mxu0 0.0
      %1295 = vmatprep.subr.mxu0 0.0
      %1296 = vmatpush1.msra.mxu0 0.0
      %1297 = vmatprep.subr.mxu0 0.0
      %1298 = vmatpush1.msra.mxu0 0.0
      %1299 = vmatprep.subr.mxu0 0.0
      %1300 = vmatpush1.msra.mxu0 0.0
      %1301 = vmatprep.subr.mxu0 0.0
      %1302 = vmatpush1.msra.mxu0 0.0
      %1303 = vmatprep.subr.mxu0 0.0
      %1304 = vmatpush1.msra.mxu0 0.0
      %1305 = vmatprep.subr.mxu0 0.0
      %1306 = vmatpush1.msra.mxu0 0.0
      %1307 = vmatprep.subr.mxu0 0.0
      %1308 = vmatpush1.msra.mxu0 0.0
      %1309 = vmatprep.subr.mxu0 0.0
      %1310 = vmatpush1.msra.mxu0 0.0
      %1311 = vmatprep.subr.mxu0 0.0
      %1312 = vmatpush1.msra.mxu0 0.0
      %1313 = vmatprep.subr.mxu0 0.0
      %1314 = vmatpush1.msra.mxu0 0.0
      %1315 = vmatprep.subr.mxu0 0.0
      %1316 = vmatpush1.msra.mxu0 0.0
      %1317 = vmatprep.subr.mxu0 0.0
      %1318 = vmatpush1.msra.mxu0 0.0
      %1319 = vmatprep.subr.mxu0 0.0
      %1320 = vmatpush1.msra.mxu0 0.0
      %1321 = vmatprep.mubr.f32.mxu0 0.0
      %1322 = vmatmul.mubr.f32.gmra.mrb[0].mxu0 %v1248
      %v1323 = vpop.f32.mrb[0].mxu0
      %v1324 = vadd.f32 0.0, %v1323
      %v1325 = vpop.f32.mrb[0].mxu0
      %v1326 = vadd.f32 0.0, %v1325
      %1327 = vdwg.mxu0
      %1328 = vmatprep.subr.mxu0 0.0
      %1329 = vmatpush1.msra.mxu0 %v270
      %1330 = vmatprep.subr.mxu0 0.0
      %1331 = vmatpush1.msra.mxu0 %v273
      %1332 = vmatprep.subr.mxu0 0.0
      %1333 = vmatpush1.msra.mxu0 %v276
      %1334 = vmatprep.subr.mxu0 0.0
      %1335 = vmatpush1.msra.mxu0 %v279
      %1336 = vmatprep.subr.mxu0 0.0
      %1337 = vmatpush1.msra.mxu0 %v282
      %1338 = vmatprep.subr.mxu0 0.0
      %1339 = vmatpush1.msra.mxu0 %v285
      %1340 = vmatprep.subr.mxu0 0.0
      %1341 = vmatpush1.msra.mxu0 %v288
      %1342 = vmatprep.subr.mxu0 0.0
      %1343 = vmatpush1.msra.mxu0 %v291
      %1344 = vmatprep.subr.mxu0 0.0
      %1345 = vmatpush1.msra.mxu0 %v294
      %1346 = vmatprep.subr.mxu0 0.0
      %1347 = vmatpush1.msra.mxu0 %v297
      %1348 = vmatprep.subr.mxu0 0.0
      %1349 = vmatpush1.msra.mxu0 %v300
      %1350 = vmatprep.subr.mxu0 0.0
      %1351 = vmatpush1.msra.mxu0 %v303
      %1352 = vmatprep.subr.mxu0 0.0
      %1353 = vmatpush1.msra.mxu0 %v306
      %1354 = vmatprep.subr.mxu0 0.0
      %1355 = vmatpush1.msra.mxu0 %v309
      %1356 = vmatprep.subr.mxu0 0.0
      %1357 = vmatpush1.msra.mxu0 %v312
      %1358 = vmatprep.subr.mxu0 0.0
      %1359 = vmatpush1.msra.mxu0 %v315
      %1360 = vmatprep.subr.mxu0 0.0
      %1361 = vmatpush1.msra.mxu0 0.0
      %1362 = vmatprep.subr.mxu0 0.0
      %1363 = vmatpush1.msra.mxu0 0.0
      %1364 = vmatprep.subr.mxu0 0.0
      %1365 = vmatpush1.msra.mxu0 0.0
      %1366 = vmatprep.subr.mxu0 0.0
      %1367 = vmatpush1.msra.mxu0 0.0
      %1368 = vmatprep.subr.mxu0 0.0
      %1369 = vmatpush1.msra.mxu0 0.0
      %1370 = vmatprep.subr.mxu0 0.0
      %1371 = vmatpush1.msra.mxu0 0.0
      %1372 = vmatprep.subr.mxu0 0.0
      %1373 = vmatpush1.msra.mxu0 0.0
      %1374 = vmatprep.subr.mxu0 0.0
      %1375 = vmatpush1.msra.mxu0 0.0
      %1376 = vmatprep.subr.mxu0 0.0
      %1377 = vmatpush1.msra.mxu0 0.0
      %1378 = vmatprep.subr.mxu0 0.0
      %1379 = vmatpush1.msra.mxu0 0.0
      %1380 = vmatprep.subr.mxu0 0.0
      %1381 = vmatpush1.msra.mxu0 0.0
      %1382 = vmatprep.subr.mxu0 0.0
      %1383 = vmatpush1.msra.mxu0 0.0
      %1384 = vmatprep.subr.mxu0 0.0
      %1385 = vmatpush1.msra.mxu0 0.0
      %1386 = vmatprep.subr.mxu0 0.0
      %1387 = vmatpush1.msra.mxu0 0.0
      %1388 = vmatprep.subr.mxu0 0.0
      %1389 = vmatpush1.msra.mxu0 0.0
      %1390 = vmatprep.subr.mxu0 0.0
      %1391 = vmatpush1.msra.mxu0 0.0
      %1392 = vmatprep.mubr.f32.mxu0 0.0
      %1393 = vmatmul.mubr.f32.gmra.mrb[0].mxu0 %v1248
      %v1394 = vpop.f32.mrb[0].mxu0
      %v1395 = vadd.f32 0.0, %v1394
      %v1396 = vpop.f32.mrb[0].mxu0
      %1397 = vdwg.mxu0
      %v1398 = vadd.f32 %v1254, %v1324
      %v1399 = vxor.u32 %v1398, 2147483648
      %v1400 = vmul.f32 %v1399, 1.442695
      %v1401 = vpow.pop %v1400
      %v1402 = vadd.f32 %v1401, 1.0
      %v1403 = vrcp.pop %v1402
      %v1404 = vmul.f32 1.0, %v1403
      %v1405 = vadd.f32 %v1255, %v1326
      %v1406 = vxor.u32 %v1405, 2147483648
      %v1407 = vmul.f32 %v1406, 1.442695
      %v1408 = vpow.pop %v1407
      %v1409 = vadd.f32 %v1408, 1.0
      %v1410 = vrcp.pop %v1409
      %v1411 = vmul.f32 1.0, %v1410
      %v1412 = vadd.f32 %v1395, %v484
      %v1413 = vmul.f32 %v1404, %v1412
      %v1414 = vadd.f32 %v1256, %v1413
      %v1415 = vtanh.pop %v1414
      %v1416 = vsub.f32 %v1248, %v1415
      %v1417 = vmul.f32 %v1411, %v1416
      %v1418 = vadd.f32 %v1415, %v1417
      %v1419 = vstv %s1250
      %vm1420 = vcmp.lt.s32.totalorder %v1419, %v267
      %v1421 = vsel %vm1420, 1, 0
      %v1422 = vcvt.s32.f32 %v1421
      %1424 = vset.pattern.permute.xlu0 0
      %1425 = vperm.xlu0 %1424, %v1422
      %v1426 = vpop.permute.xlu0 %1425
      %v1428 = vmul.f32 %v1426, %v1418
      %s1429 = smul.u32 %s1250, 8
      %s1430 = scalar_lea.vmem %s261, %s1429
      %1431 = vst [vmem:[%s1430] sm:$0xff] %v1428
      %v1432 = vsub.f32 %v1418, %v1248
      %v1433 = vmul.f32 %v1426, %v1432
      %v1434 = vadd.f32 %v1248, %v1433
      %s1435 = smul.u32 %s17, 4294967291
      %s1436 = sadd.s32 %s1435, 6
      %s1437 = smul.u32 %s1436, 3
      %s1438 = smul.addr %s1437, 8
      %s1439 = scalar_lea.vmem %s248, %s1438
      %v1440 = vld [vmem:[%s1439] sm:$0xff]
      %v1441 = vld [vmem:[%s1439 + $0x8] sm:$0xff]
      %v1442 = vld [vmem:[%s1439 + $0x10] sm:$0xff]
      %1443 = vmatprep.subr.mxu0 %v269
      %1444 = vmatpush1.msra.mxu0 %v268
      %1445 = vmatprep.subr.mxu0 %v272
      %1446 = vmatpush1.msra.mxu0 %v271
      %1447 = vmatprep.subr.mxu0 %v275
      %1448 = vmatpush1.msra.mxu0 %v274
      %1449 = vmatprep.subr.mxu0 %v278
      %1450 = vmatpush1.msra.mxu0 %v277
      %1451 = vmatprep.subr.mxu0 %v281
      %1452 = vmatpush1.msra.mxu0 %v280
      %1453 = vmatprep.subr.mxu0 %v284
      %1454 = vmatpush1.msra.mxu0 %v283
      %1455 = vmatprep.subr.mxu0 %v287
      %1456 = vmatpush1.msra.mxu0 %v286
      %1457 = vmatprep.subr.mxu0 %v290
      %1458 = vmatpush1.msra.mxu0 %v289
      %1459 = vmatprep.subr.mxu0 %v293
      %1460 = vmatpush1.msra.mxu0 %v292
      %1461 = vmatprep.subr.mxu0 %v296
      %1462 = vmatpush1.msra.mxu0 %v295
      %1463 = vmatprep.subr.mxu0 %v299
      %1464 = vmatpush1.msra.mxu0 %v298
      %1465 = vmatprep.subr.mxu0 %v302
      %1466 = vmatpush1.msra.mxu0 %v301
      %1467 = vmatprep.subr.mxu0 %v305
      %1468 = vmatpush1.msra.mxu0 %v304
      %1469 = vmatprep.subr.mxu0 %v308
      %1470 = vmatpush1.msra.mxu0 %v307
      %1471 = vmatprep.subr.mxu0 %v311
      %1472 = vmatpush1.msra.mxu0 %v310
      %1473 = vmatprep.subr.mxu0 %v314
      %1474 = vmatpush1.msra.mxu0 %v313
      %1475 = vmatprep.subr.mxu0 0.0
      %1476 = vmatpush1.msra.mxu0 0.0
      %1477 = vmatprep.subr.mxu0 0.0
      %1478 = vmatpush1.msra.mxu0 0.0
      %1479 = vmatprep.subr.mxu0 0.0
      %1480 = vmatpush1.msra.mxu0 0.0
      %1481 = vmatprep.subr.mxu0 0.0
      %1482 = vmatpush1.msra.mxu0 0.0
      %1483 = vmatprep.subr.mxu0 0.0
      %1484 = vmatpush1.msra.mxu0 0.0
      %1485 = vmatprep.subr.mxu0 0.0
      %1486 = vmatpush1.msra.mxu0 0.0
      %1487 = vmatprep.subr.mxu0 0.0
      %1488 = vmatpush1.msra.mxu0 0.0
      %1489 = vmatprep.subr.mxu0 0.0
      %1490 = vmatpush1.msra.mxu0 0.0
      %1491 = vmatprep.subr.mxu0 0.0
      %1492 = vmatpush1.msra.mxu0 0.0
      %1493 = vmatprep.subr.mxu0 0.0
      %1494 = vmatpush1.msra.mxu0 0.0
      %1495 = vmatprep.subr.mxu0 0.0
      %1496 = vmatpush1.msra.mxu0 0.0
      %1497 = vmatprep.subr.mxu0 0.0
      %1498 = vmatpush1.msra.mxu0 0.0
      %1499 = vmatprep.subr.mxu0 0.0
      %1500 = vmatpush1.msra.mxu0 0.0
      %1501 = vmatprep.subr.mxu0 0.0
      %1502 = vmatpush1.msra.mxu0 0.0
      %1503 = vmatprep.subr.mxu0 0.0
      %1504 = vmatpush1.msra.mxu0 0.0
      %1505 = vmatprep.subr.mxu0 0.0
      %1506 = vmatpush1.msra.mxu0 0.0
      %1507 = vmatprep.mubr.f32.mxu0 0.0
      %1508 = vmatmul.mubr.f32.gmra.mrb[0].mxu0 %v1434
      %v1509 = vpop.f32.mrb[0].mxu0
      %v1510 = vadd.f32 0.0, %v1509
      %v1511 = vpop.f32.mrb[0].mxu0
      %v1512 = vadd.f32 0.0, %v1511
      %1513 = vdwg.mxu0
      %1514 = vmatprep.subr.mxu0 0.0
      %1515 = vmatpush1.msra.mxu0 %v270
      %1516 = vmatprep.subr.mxu0 0.0
      %1517 = vmatpush1.msra.mxu0 %v273
      %1518 = vmatprep.subr.mxu0 0.0
      %1519 = vmatpush1.msra.mxu0 %v276
      %1520 = vmatprep.subr.mxu0 0.0
      %1521 = vmatpush1.msra.mxu0 %v279
      %1522 = vmatprep.subr.mxu0 0.0
      %1523 = vmatpush1.msra.mxu0 %v282
      %1524 = vmatprep.subr.mxu0 0.0
      %1525 = vmatpush1.msra.mxu0 %v285
      %1526 = vmatprep.subr.mxu0 0.0
      %1527 = vmatpush1.msra.mxu0 %v288
      %1528 = vmatprep.subr.mxu0 0.0
      %1529 = vmatpush1.msra.mxu0 %v291
      %1530 = vmatprep.subr.mxu0 0.0
      %1531 = vmatpush1.msra.mxu0 %v294
      %1532 = vmatprep.subr.mxu0 0.0
      %1533 = vmatpush1.msra.mxu0 %v297
      %1534 = vmatprep.subr.mxu0 0.0
      %1535 = vmatpush1.msra.mxu0 %v300
      %1536 = vmatprep.subr.mxu0 0.0
      %1537 = vmatpush1.msra.mxu0 %v303
      %1538 = vmatprep.subr.mxu0 0.0
      %1539 = vmatpush1.msra.mxu0 %v306
      %1540 = vmatprep.subr.mxu0 0.0
      %1541 = vmatpush1.msra.mxu0 %v309
      %1542 = vmatprep.subr.mxu0 0.0
      %1543 = vmatpush1.msra.mxu0 %v312
      %1544 = vmatprep.subr.mxu0 0.0
      %1545 = vmatpush1.msra.mxu0 %v315
      %1546 = vmatprep.subr.mxu0 0.0
      %1547 = vmatpush1.msra.mxu0 0.0
      %1548 = vmatprep.subr.mxu0 0.0
      %1549 = vmatpush1.msra.mxu0 0.0
      %1550 = vmatprep.subr.mxu0 0.0
      %1551 = vmatpush1.msra.mxu0 0.0
      %1552 = vmatprep.subr.mxu0 0.0
      %1553 = vmatpush1.msra.mxu0 0.0
      %1554 = vmatprep.subr.mxu0 0.0
      %1555 = vmatpush1.msra.mxu0 0.0
      %1556 = vmatprep.subr.mxu0 0.0
      %1557 = vmatpush1.msra.mxu0 0.0
      %1558 = vmatprep.subr.mxu0 0.0
      %1559 = vmatpush1.msra.mxu0 0.0
      %1560 = vmatprep.subr.mxu0 0.0
      %1561 = vmatpush1.msra.mxu0 0.0
      %1562 = vmatprep.subr.mxu0 0.0
      %1563 = vmatpush1.msra.mxu0 0.0
      %1564 = vmatprep.subr.mxu0 0.0
      %1565 = vmatpush1.msra.mxu0 0.0
      %1566 = vmatprep.subr.mxu0 0.0
      %1567 = vmatpush1.msra.mxu0 0.0
      %1568 = vmatprep.subr.mxu0 0.0
      %1569 = vmatpush1.msra.mxu0 0.0
      %1570 = vmatprep.subr.mxu0 0.0
      %1571 = vmatpush1.msra.mxu0 0.0
      %1572 = vmatprep.subr.mxu0 0.0
      %1573 = vmatpush1.msra.mxu0 0.0
      %1574 = vmatprep.subr.mxu0 0.0
      %1575 = vmatpush1.msra.mxu0 0.0
      %1576 = vmatprep.subr.mxu0 0.0
      %1577 = vmatpush1.msra.mxu0 0.0
      %1578 = vmatprep.mubr.f32.mxu0 0.0
      %1579 = vmatmul.mubr.f32.gmra.mrb[0].mxu0 %v1434
      %v1580 = vpop.f32.mrb[0].mxu0
      %v1581 = vadd.f32 0.0, %v1580
      %v1582 = vpop.f32.mrb[0].mxu0
      %1583 = vdwg.mxu0
      %v1584 = vadd.f32 %v1440, %v1510
      %v1585 = vxor.u32 %v1584, 2147483648
      %v1586 = vmul.f32 %v1585, 1.442695
      %v1587 = vpow.pop %v1586
      %v1588 = vadd.f32 %v1587, 1.0
      %v1589 = vrcp.pop %v1588
      %v1590 = vmul.f32 1.0, %v1589
      %v1591 = vadd.f32 %v1441, %v1512
      %v1592 = vxor.u32 %v1591, 2147483648
      %v1593 = vmul.f32 %v1592, 1.442695
      %v1594 = vpow.pop %v1593
      %v1595 = vadd.f32 %v1594, 1.0
      %v1596 = vrcp.pop %v1595
      %v1597 = vmul.f32 1.0, %v1596
      %v1598 = vadd.f32 %v1581, %v484
      %v1599 = vmul.f32 %v1590, %v1598
      %v1600 = vadd.f32 %v1442, %v1599
      %v1601 = vtanh.pop %v1600
      %v1602 = vsub.f32 %v1434, %v1601
      %v1603 = vmul.f32 %v1597, %v1602
      %v1604 = vadd.f32 %v1601, %v1603
      %v1605 = vstv %s1436
      %vm1606 = vcmp.lt.s32.totalorder %v1605, %v267
      %v1607 = vsel %vm1606, 1, 0
      %v1608 = vcvt.s32.f32 %v1607
      %1610 = vset.pattern.permute.xlu0 0
      %1611 = vperm.xlu0 %1610, %v1608
      %v1612 = vpop.permute.xlu0 %1611
      %v1614 = vmul.f32 %v1612, %v1604
      %s1615 = smul.u32 %s1436, 8
      %s1616 = scalar_lea.vmem %s261, %s1615
      %1617 = vst [vmem:[%s1616] sm:$0xff] %v1614
      %v1618 = vsub.f32 %v1604, %v1434
      %v1619 = vmul.f32 %v1612, %v1618
      %v1620 = vadd.f32 %v1434, %v1619
      %s1621 = smul.u32 %s17, 4294967289
      %s1622 = sadd.s32 %s1621, 7
      %s1623 = smul.u32 %s1622, 3
      %s1624 = smul.addr %s1623, 8
      %s1625 = scalar_lea.vmem %s248, %s1624
      %v1626 = vld [vmem:[%s1625] sm:$0xff]
      %v1627 = vld [vmem:[%s1625 + $0x8] sm:$0xff]
      %v1628 = vld [vmem:[%s1625 + $0x10] sm:$0xff]
      %1629 = vmatprep.subr.mxu0 %v269
      %1630 = vmatpush1.msra.mxu0 %v268
      %1631 = vmatprep.subr.mxu0 %v272
      %1632 = vmatpush1.msra.mxu0 %v271
      %1633 = vmatprep.subr.mxu0 %v275
      %1634 = vmatpush1.msra.mxu0 %v274
      %1635 = vmatprep.subr.mxu0 %v278
      %1636 = vmatpush1.msra.mxu0 %v277
      %1637 = vmatprep.subr.mxu0 %v281
      %1638 = vmatpush1.msra.mxu0 %v280
      %1639 = vmatprep.subr.mxu0 %v284
      %1640 = vmatpush1.msra.mxu0 %v283
      %1641 = vmatprep.subr.mxu0 %v287
      %1642 = vmatpush1.msra.mxu0 %v286
      %1643 = vmatprep.subr.mxu0 %v290
      %1644 = vmatpush1.msra.mxu0 %v289
      %1645 = vmatprep.subr.mxu0 %v293
      %1646 = vmatpush1.msra.mxu0 %v292
      %1647 = vmatprep.subr.mxu0 %v296
      %1648 = vmatpush1.msra.mxu0 %v295
      %1649 = vmatprep.subr.mxu0 %v299
      %1650 = vmatpush1.msra.mxu0 %v298
      %1651 = vmatprep.subr.mxu0 %v302
      %1652 = vmatpush1.msra.mxu0 %v301
      %1653 = vmatprep.subr.mxu0 %v305
      %1654 = vmatpush1.msra.mxu0 %v304
      %1655 = vmatprep.subr.mxu0 %v308
      %1656 = vmatpush1.msra.mxu0 %v307
      %1657 = vmatprep.subr.mxu0 %v311
      %1658 = vmatpush1.msra.mxu0 %v310
      %1659 = vmatprep.subr.mxu0 %v314
      %1660 = vmatpush1.msra.mxu0 %v313
      %1661 = vmatprep.subr.mxu0 0.0
      %1662 = vmatpush1.msra.mxu0 0.0
      %1663 = vmatprep.subr.mxu0 0.0
      %1664 = vmatpush1.msra.mxu0 0.0
      %1665 = vmatprep.subr.mxu0 0.0
      %1666 = vmatpush1.msra.mxu0 0.0
      %1667 = vmatprep.subr.mxu0 0.0
      %1668 = vmatpush1.msra.mxu0 0.0
      %1669 = vmatprep.subr.mxu0 0.0
      %1670 = vmatpush1.msra.mxu0 0.0
      %1671 = vmatprep.subr.mxu0 0.0
      %1672 = vmatpush1.msra.mxu0 0.0
      %1673 = vmatprep.subr.mxu0 0.0
      %1674 = vmatpush1.msra.mxu0 0.0
      %1675 = vmatprep.subr.mxu0 0.0
      %1676 = vmatpush1.msra.mxu0 0.0
      %1677 = vmatprep.subr.mxu0 0.0
      %1678 = vmatpush1.msra.mxu0 0.0
      %1679 = vmatprep.subr.mxu0 0.0
      %1680 = vmatpush1.msra.mxu0 0.0
      %1681 = vmatprep.subr.mxu0 0.0
      %1682 = vmatpush1.msra.mxu0 0.0
      %1683 = vmatprep.subr.mxu0 0.0
      %1684 = vmatpush1.msra.mxu0 0.0
      %1685 = vmatprep.subr.mxu0 0.0
      %1686 = vmatpush1.msra.mxu0 0.0
      %1687 = vmatprep.subr.mxu0 0.0
      %1688 = vmatpush1.msra.mxu0 0.0
      %1689 = vmatprep.subr.mxu0 0.0
      %1690 = vmatpush1.msra.mxu0 0.0
      %1691 = vmatprep.subr.mxu0 0.0
      %1692 = vmatpush1.msra.mxu0 0.0
      %1693 = vmatprep.mubr.f32.mxu0 0.0
      %1694 = vmatmul.mubr.f32.gmra.mrb[0].mxu0 %v1620
      %v1695 = vpop.f32.mrb[0].mxu0
      %v1696 = vadd.f32 0.0, %v1695
      %v1697 = vpop.f32.mrb[0].mxu0
      %v1698 = vadd.f32 0.0, %v1697
      %1699 = vdwg.mxu0
      %1700 = vmatprep.subr.mxu0 0.0
      %1701 = vmatpush1.msra.mxu0 %v270
      %1702 = vmatprep.subr.mxu0 0.0
      %1703 = vmatpush1.msra.mxu0 %v273
      %1704 = vmatprep.subr.mxu0 0.0
      %1705 = vmatpush1.msra.mxu0 %v276
      %1706 = vmatprep.subr.mxu0 0.0
      %1707 = vmatpush1.msra.mxu0 %v279
      %1708 = vmatprep.subr.mxu0 0.0
      %1709 = vmatpush1.msra.mxu0 %v282
      %1710 = vmatprep.subr.mxu0 0.0
      %1711 = vmatpush1.msra.mxu0 %v285
      %1712 = vmatprep.subr.mxu0 0.0
      %1713 = vmatpush1.msra.mxu0 %v288
      %1714 = vmatprep.subr.mxu0 0.0
      %1715 = vmatpush1.msra.mxu0 %v291
      %1716 = vmatprep.subr.mxu0 0.0
      %1717 = vmatpush1.msra.mxu0 %v294
      %1718 = vmatprep.subr.mxu0 0.0
      %1719 = vmatpush1.msra.mxu0 %v297
      %1720 = vmatprep.subr.mxu0 0.0
      %1721 = vmatpush1.msra.mxu0 %v300
      %1722 = vmatprep.subr.mxu0 0.0
      %1723 = vmatpush1.msra.mxu0 %v303
      %1724 = vmatprep.subr.mxu0 0.0
      %1725 = vmatpush1.msra.mxu0 %v306
      %1726 = vmatprep.subr.mxu0 0.0
      %1727 = vmatpush1.msra.mxu0 %v309
      %1728 = vmatprep.subr.mxu0 0.0
      %1729 = vmatpush1.msra.mxu0 %v312
      %1730 = vmatprep.subr.mxu0 0.0
      %1731 = vmatpush1.msra.mxu0 %v315
      %1732 = vmatprep.subr.mxu0 0.0
      %1733 = vmatpush1.msra.mxu0 0.0
      %1734 = vmatprep.subr.mxu0 0.0
      %1735 = vmatpush1.msra.mxu0 0.0
      %1736 = vmatprep.subr.mxu0 0.0
      %1737 = vmatpush1.msra.mxu0 0.0
      %1738 = vmatprep.subr.mxu0 0.0
      %1739 = vmatpush1.msra.mxu0 0.0
      %1740 = vmatprep.subr.mxu0 0.0
      %1741 = vmatpush1.msra.mxu0 0.0
      %1742 = vmatprep.subr.mxu0 0.0
      %1743 = vmatpush1.msra.mxu0 0.0
      %1744 = vmatprep.subr.mxu0 0.0
      %1745 = vmatpush1.msra.mxu0 0.0
      %1746 = vmatprep.subr.mxu0 0.0
      %1747 = vmatpush1.msra.mxu0 0.0
      %1748 = vmatprep.subr.mxu0 0.0
      %1749 = vmatpush1.msra.mxu0 0.0
      %1750 = vmatprep.subr.mxu0 0.0
      %1751 = vmatpush1.msra.mxu0 0.0
      %1752 = vmatprep.subr.mxu0 0.0
      %1753 = vmatpush1.msra.mxu0 0.0
      %1754 = vmatprep.subr.mxu0 0.0
      %1755 = vmatpush1.msra.mxu0 0.0
      %1756 = vmatprep.subr.mxu0 0.0
      %1757 = vmatpush1.msra.mxu0 0.0
      %1758 = vmatprep.subr.mxu0 0.0
      %1759 = vmatpush1.msra.mxu0 0.0
      %1760 = vmatprep.subr.mxu0 0.0
      %1761 = vmatpush1.msra.mxu0 0.0
      %1762 = vmatprep.subr.mxu0 0.0
      %1763 = vmatpush1.msra.mxu0 0.0
      %1764 = vmatprep.mubr.f32.mxu0 0.0
      %1765 = vmatmul.mubr.f32.gmra.mrb[0].mxu0 %v1620
      %v1766 = vpop.f32.mrb[0].mxu0
      %v1767 = vadd.f32 0.0, %v1766
      %v1768 = vpop.f32.mrb[0].mxu0
      %1769 = vdwg.mxu0
      %v1770 = vadd.f32 %v1626, %v1696
      %v1771 = vxor.u32 %v1770, 2147483648
      %v1772 = vmul.f32 %v1771, 1.442695
      %v1773 = vpow.pop %v1772
      %v1774 = vadd.f32 %v1773, 1.0
      %v1775 = vrcp.pop %v1774
      %v1776 = vmul.f32 1.0, %v1775
      %v1777 = vadd.f32 %v1627, %v1698
      %v1778 = vxor.u32 %v1777, 2147483648
      %v1779 = vmul.f32 %v1778, 1.442695
      %v1780 = vpow.pop %v1779
      %v1781 = vadd.f32 %v1780, 1.0
      %v1782 = vrcp.pop %v1781
      %v1783 = vmul.f32 1.0, %v1782
      %v1784 = vadd.f32 %v1767, %v484
      %v1785 = vmul.f32 %v1776, %v1784
      %v1786 = vadd.f32 %v1628, %v1785
      %v1787 = vtanh.pop %v1786
      %v1788 = vsub.f32 %v1620, %v1787
      %v1789 = vmul.f32 %v1783, %v1788
      %v1790 = vadd.f32 %v1787, %v1789
      %v1791 = vstv %s1622
      %vm1792 = vcmp.lt.s32.totalorder %v1791, %v267
      %v1793 = vsel %vm1792, 1, 0
      %v1794 = vcvt.s32.f32 %v1793
      %1796 = vset.pattern.permute.xlu0 0
      %1797 = vperm.xlu0 %1796, %v1794
      %v1798 = vpop.permute.xlu0 %1797
      %v1800 = vmul.f32 %v1798, %v1790
      %s1801 = smul.u32 %s1622, 8
      %s1802 = scalar_lea.vmem %s261, %s1801
      %1803 = vst [vmem:[%s1802] sm:$0xff] %v1800
      %v1804 = vsub.f32 %v1790, %v1620
      %v1805 = vmul.f32 %v1798, %v1804
      %v1806 = vadd.f32 %v1620, %v1805
      %1807 = vst [vmem:[%s266] sm:$0xff] %v1806
      %s1808 = smul.u32 8, %s17
      %p1809 = scmp.lt.s32.totalorder %s1808, 15
      %s1810 = scalar_select %p1809, %s1808, 15
      %s1811 = smul.addr %s1810, 8
      %s1812 = scalar_lea.vmem %s4, %s1811
      %p1813 = scmp.lt.s32.totalorder %s17, 1
      %s1814 = scalar_select %p1813, %s17, 1
      %s1815 = smul.addr %s1814, 8
      %s1816 = scalar_lea.vmem %s5, %s1815
      // Predicated region
      $region37: #{encoder_forward.2} parent=35 // pred_check
        %p1817 = pneg %p129
      $region38: #{encoder_forward.2} parent=35 // pred_check_branch
        %1819 = sbr.rel (%p1817) target = $region40
      $region39: #{encoder_forward.2} parent=35 // pred_region
        %s1820 = smul.u32 8, %s17
      $region40: #{encoder_forward.2} parent=35 // pred_fallthru
        _
      // Predicated region
      $region41: #{encoder_forward.2} parent=35 // pred_check
        %p1821 = pneg %p155
      $region42: #{encoder_forward.2} parent=35 // pred_check_branch
        %1823 = sbr.rel (%p1821) target = $region44
      $region43: #{encoder_forward.2} parent=35 // pred_region
        _
      $region44: #{encoder_forward.2} parent=35 // pred_fallthru
        _
    $region36: #{encoder_forward.2} parent=5 // pred_fallthru
      _
    %p1824 = scmp.le.s32.totalorder 2, %s12
    // Predicated region
    $region45: #{encoder_forward.2} parent=5 // pred_check
      %p1825 = pneg %p1824
    $region46: #{encoder_forward.2} parent=5 // pred_check_branch
      %1827 = sbr.rel (%p1825) target = $region48
    $region47: #{encoder_forward.2} parent=5 // pred_region
      %s1828 = ssub.s32 %s12, 2
      // Predicated region
      $region49: #{encoder_forward.2} parent=47 // pred_check
        %p1829 = pneg %p135
      $region50: #{encoder_forward.2} parent=47 // pred_check_branch
        %1831 = sbr.rel (%p1829) target = $region52
      $region51: #{encoder_forward.2} parent=47 // pred_region
        %s1832 = smul.u32 8, %s18
        %p1833 = scmp.lt.s32.totalorder %s1832, 15
        %s1834 = scalar_select %p1833, %s1832, 15
        %s1835 = smul.addr %s1834, 8
        %s1836 = scalar_lea.vmem %s4, %s1835
      $region52: #{encoder_forward.2} parent=47 // pred_fallthru
        _
      // Predicated region
      $region53: #{encoder_forward.2} parent=47 // pred_check
        %p1837 = pneg %p161
      $region54: #{encoder_forward.2} parent=47 // pred_check_branch
        %1839 = sbr.rel (%p1837) target = $region56
      $region55: #{encoder_forward.2} parent=47 // pred_region
        %p1840 = scmp.lt.s32.totalorder %s18, 1
        %s1841 = scalar_select %p1840, %s18, 1
        %s1842 = smul.addr %s1841, 8
        %s1843 = scalar_lea.vmem %s5, %s1842
      $region56: #{encoder_forward.2} parent=47 // pred_fallthru
        _
    $region48: #{encoder_forward.2} parent=5 // pred_fallthru
      _
  $region6: #{encoder_forward.2} parent=0 // loop_footer
    %s16 = sadd.s32 1, %s12
  $region7: #{encoder_forward.2} parent=0 // loop_footer_branch
    %11 = sbr.rel target = $region3
  $region8: #{encoder_forward.2} parent=0 // loop_exit
    _

</llo_original>
